<compile_context>
chip_gen: v6e
topology: v6e:2x2x1
jax: 0.10.0
libtpu: 0.0.40
codegen_flags: <defaults>
</compile_context>

<pallas_src>
import functools

import jax
import jax.numpy as jnp
import numpy as np
from jax.experimental import pallas as pl
from jax.experimental.pallas import tpu as pltpu

LANE = 128


def _round_up(n, m):
    return ((n + m - 1) // m) * m


# ---------------------------------------------------------------------------
# Kernel: one grid step == one image.
#   x_ref     : (1, M, K1p)        bf16   im2col of conv1 input (K = 9*Cin)
#   w1_ref    : (K1p, Cp)          bf16   conv1 weight, BN1 folded
#   b1_ref    : (1, Cp)            f32
#   w2_ref    : (3, 3*Cp, Cp)      bf16   conv2 weight per dy, BN2 folded
#   wskip_ref : (Kskip, Cp)        bf16   skip path (identity / 1x1 downsample)
#   b2_ref    : (1, Cp)            f32    b2 + b_skip
#   o_ref     : (1, M, Cp)         bf16
#   h1s_ref   : ((Ho+2)*Wo, 3*Cp)  bf16   scratch: W-shifted copies of relu(conv1)
# ---------------------------------------------------------------------------
def _basicblock_kernel(x_ref, w1_ref, b1_ref, w2_ref, wskip_ref, b2_ref,
                       o_ref, h1s_ref, *, Wo, R, NC, cout_p, skip_lo, kskip):
    MC = R * Wo                     # matrix rows per chunk (<= 128)
    Ho = NC * R
    C3 = 3 * cout_p

    # Zero only the 1-row top/bottom halo strips of the staged conv2 input
    # (the W halo is handled by the column masks below).  Done every step,
    # NOT gated on program_id, so it is safe with a parallel grid.
    h1s_ref[0:Wo, :] = jnp.zeros((Wo, C3), h1s_ref.dtype)
    h1s_ref[(Ho + 1) * Wo:(Ho + 2) * Wo, :] = jnp.zeros((Wo, C3), h1s_ref.dtype)

    # Within-row (W) position of each flattened pixel row, for halo masking.
    col = jax.lax.broadcasted_iota(jnp.int32, (MC, 1), 0) % Wo

    # ---- phase 1: conv1 (single dense-K matmul) + folded BN1 + ReLU,
    #      staged into scratch as three lane-aligned W-shifted copies.
    @pl.loop(0, NC)
    def _(c):
        off = pl.multiple_of(c * MC, MC)
        xc = x_ref[0, pl.ds(off, MC), :]
        h1 = jnp.dot(xc, w1_ref[...], preferred_element_type=jnp.float32)
        h1 = jnp.maximum(h1 + b1_ref[...], 0.0)

        dst = pl.multiple_of(off + Wo, Wo)
        # dx = 1 (centre): unshifted
        h1s_ref[pl.ds(dst, MC), cout_p:2 * cout_p] = h1.astype(h1s_ref.dtype)
        # dx = 0: value at x is h1[.., x-1]  -> roll down by 1, zero x == 0
        v0 = jnp.where(col == 0, 0.0, pltpu.roll(h1, 1, 0))
        h1s_ref[pl.ds(dst, MC), 0:cout_p] = v0.astype(h1s_ref.dtype)
        # dx = 2: value at x is h1[.., x+1]  -> roll up by 1, zero x == Wo-1
        v2 = jnp.where(col == Wo - 1, 0.0, pltpu.roll(h1, MC - 1, 0))
        h1s_ref[pl.ds(dst, MC), 2 * cout_p:C3] = v2.astype(h1s_ref.dtype)

    # ---- phase 2: conv2 (3 matmuls, K = 3*Cp) + folded BN2 + skip + ReLU.
    #      The skip matmul (centre-tap columns of x_ref) initialises the
    #      accumulator, so there is no extra skip DMA and no zero-init.
    @pl.loop(0, NC)
    def _(c):
        off = pl.multiple_of(c * MC, MC)
        xs = x_ref[0, pl.ds(off, MC), skip_lo:skip_lo + kskip]
        acc = jnp.dot(xs, wskip_ref[...], preferred_element_type=jnp.float32)
        for dy in range(3):
            src = pl.multiple_of(off + dy * Wo, Wo)
            slab = h1s_ref[pl.ds(src, MC), :]          # (MC, 3*Cp), aligned read
            acc = acc + jnp.dot(slab, w2_ref[dy],
                                preferred_element_type=jnp.float32)
        out = jnp.maximum(acc + b2_ref[...], 0.0)
        o_ref[0, pl.ds(off, MC), :] = out.astype(o_ref.dtype)


# ---------------------------------------------------------------------------
# Parameters (mirror nn.Module shapes; BN used in inference form).
# ---------------------------------------------------------------------------
def _bn_params(key, c):
    k1, k2, k3, k4 = jax.random.split(key, 4)
    return dict(
        gamma=1.0 + 0.1 * jax.random.normal(k1, (c,), jnp.float32),
        beta=0.1 * jax.random.normal(k2, (c,), jnp.float32),
        mean=0.1 * jax.random.normal(k3, (c,), jnp.float32),
        var=1.0 + jnp.abs(0.1 * jax.random.normal(k4, (c,), jnp.float32)),
    )


def _conv_params(key, cout, cin, kh, kw):
    k1, k2 = jax.random.split(key)
    return dict(
        w=0.1 * jax.random.normal(k1, (cout, cin, kh, kw), jnp.float32),  # OIHW
        b=0.05 * jax.random.normal(k2, (cout,), jnp.float32),
    )


def make_basicblock_params(key, in_channels, out_channels, apply_downsample):
    keys = jax.random.split(key, 6)
    p = {
        "conv1": _conv_params(keys[0], out_channels, in_channels, 3, 3),
        "bn1": _bn_params(keys[1], out_channels),
        "conv2": _conv_params(keys[2], out_channels, out_channels, 3, 3),
        "bn2": _bn_params(keys[3], out_channels),
    }
    if apply_downsample:
        p["convd"] = _conv_params(keys[4], out_channels, in_channels, 1, 1)
        p["bnd"] = _bn_params(keys[5], out_channels)
    return p


def _fold_bn(conv, bn, eps=1e-5):
    """Fold BN (inference) + conv bias into a scaled weight and a bias."""
    scale = bn["gamma"] * jax.lax.rsqrt(bn["var"] + eps)
    w = conv["w"] * scale[:, None, None, None]            # per out-channel (OIHW)
    b = (conv["b"] - bn["mean"]) * scale + bn["beta"]
    return w, b


# ---------------------------------------------------------------------------
# Wrapper: bf16 im2col + weight packing (cheap glue) + single fused pallas_call.
# ---------------------------------------------------------------------------
def _basicblock_nhwc(x, params, stride, apply_downsample):
    N, H, W, Cin = x.shape
    Cout = params["conv1"]["w"].shape[0]
    s = stride
    Ho = (H + 2 - 3) // s + 1
    Wo = (W + 2 - 3) // s + 1
    M = Ho * Wo
    cout_p = _round_up(Cout, LANE)
    K1 = 9 * Cin
    K1p = _round_up(K1, LANE)

    # Dense-K im2col of the input (bf16, real channels -- no 128 channel pad):
    #   x_col[n, oy*Wo+ox, (3*dy+dx)*Cin + ci] = x_pad[n, oy*s+dy, ox*s+dx, ci]
    xb = x.astype(jnp.bfloat16)
    xp = jnp.pad(xb, ((0, 0), (1, 1), (1, 1), (0, 0)))
    taps = [xp[:, dy:dy + (Ho - 1) * s + 1:s, dx:dx + (Wo - 1) * s + 1:s, :]
            for dy in range(3) for dx in range(3)]
    x_col = jnp.concatenate(taps, axis=-1).reshape(N, M, K1)
    x_col = jnp.pad(x_col, ((0, 0), (0, 0), (0, K1p - K1)))

    # Fold BN into conv weights/biases and pack for the kernel.
    w1f, b1f = _fold_bn(params["conv1"], params["bn1"])
    w2f, b2f = _fold_bn(params["conv2"], params["bn2"])

    w1 = jnp.transpose(w1f, (2, 3, 1, 0)).reshape(K1, Cout)
    w1 = jnp.pad(w1, ((0, K1p - K1), (0, cout_p - Cout))).astype(jnp.bfloat16)
    b1 = jnp.pad(b1f[None, :], ((0, 0), (0, cout_p - Cout))).astype(jnp.float32)

    w2 = jnp.transpose(w2f, (2, 3, 1, 0))                       # (ky, kx, ci, co)
    w2 = jnp.pad(w2, ((0, 0), (0, 0), (0, cout_p - Cout), (0, cout_p - Cout)))
    w2 = w2.reshape(3, 3 * cout_p, cout_p).astype(jnp.bfloat16)

    # Skip path as an extra matmul against the centre-tap columns of x_col
    # (centre tap == x[oy*s, ox*s, :], i.e. exactly the 1x1/identity skip input).
    if apply_downsample:
        wdf, bdf = _fold_bn(params["convd"], params["bnd"])
        skip_blk = wdf[:, :, 0, 0].T                            # (Cin, Cout)
        b_skip = bdf
    else:
        assert Cin == Cout and s == 1, (
            "identity skip requires in_channels == out_channels and stride == 1")
        skip_blk = jnp.eye(Cin, dtype=jnp.float32)
        b_skip = jnp.zeros((Cout,), jnp.float32)

    # Centre tap occupies im2col columns [4*Cin, 5*Cin); restrict the skip
    # matmul to the single 128-lane block containing it when possible.
    blk0 = (4 * Cin) // LANE
    if (5 * Cin - 1) // LANE == blk0:
        skip_lo, kskip = blk0 * LANE, LANE
    else:
        skip_lo, kskip = 0, K1p
    wskip = jnp.zeros((kskip, cout_p), jnp.float32)
    wskip = wskip.at[4 * Cin - skip_lo:5 * Cin - skip_lo, :Cout].set(skip_blk)
    wskip = wskip.astype(jnp.bfloat16)

    b2 = jnp.pad((b2f + b_skip)[None, :],
                 ((0, 0), (0, cout_p - Cout))).astype(jnp.float32)

    # Row chunking: largest whole-image-row chunk with <= 128 matrix rows.
    max_rows = max(1, 128 // Wo)
    R = 1
    for r in range(1, Ho + 1):
        if Ho % r == 0 and r <= max_rows:
            R = r
    NC = Ho // R

    kernel = functools.partial(
        _basicblock_kernel, Wo=Wo, R=R, NC=NC, cout_p=cout_p,
        skip_lo=skip_lo, kskip=kskip)

    out = pl.pallas_call(
        kernel,
        out_shape=jax.ShapeDtypeStruct((N, M, cout_p), jnp.bfloat16),
        grid_spec=pltpu.PrefetchScalarGridSpec(
            num_scalar_prefetch=0,
            grid=(N,),          # "parallel" -> both v7x TCs; on v5e/v6e the
                                # batch could be folded into M instead.
            in_specs=[
                pl.BlockSpec((1, M, K1p), lambda n: (n, 0, 0)),
                pl.BlockSpec((K1p, cout_p), lambda n: (0, 0)),
                pl.BlockSpec((1, cout_p), lambda n: (0, 0)),
                pl.BlockSpec((3, 3 * cout_p, cout_p), lambda n: (0, 0, 0)),
                pl.BlockSpec((kskip, cout_p), lambda n: (0, 0)),
                pl.BlockSpec((1, cout_p), lambda n: (0, 0)),
            ],
            out_specs=pl.BlockSpec((1, M, cout_p), lambda n: (n, 0, 0)),
            scratch_shapes=[
                pltpu.VMEM(((Ho + 2) * Wo, 3 * cout_p), jnp.bfloat16)],
        ),
        compiler_params=pltpu.CompilerParams(
            dimension_semantics=("parallel",),
            vmem_limit_bytes=8 * 1024 * 1024,
        ),
    )(x_col, w1, b1, w2, wskip, b2)

    return out.reshape(N, Ho, Wo, cout_p)[..., :Cout]


@functools.partial(jax.jit, static_argnames=("stride", "apply_downsample"))
def basic_block_forward(x_nchw, params, stride, apply_downsample):
    # TODO(synk): in a full ResNet, keep the bf16 padded-NHWC layout between
    # blocks instead of slicing + transposing back to NCHW every block.
    x = jnp.transpose(x_nchw.astype(jnp.bfloat16), (0, 2, 3, 1))  # NCHW -> NHWC
    y = _basicblock_nhwc(x, params, stride, apply_downsample)
    return jnp.transpose(y, (0, 3, 1, 2)).astype(jnp.float32)     # NHWC -> NCHW


# ---------------------------------------------------------------------------
# Reference (lax convs, same folded-BN / bf16-operand math) for verification.
# ---------------------------------------------------------------------------
def basicblock_ref(x_nchw, params, stride, apply_downsample):
    x = jnp.transpose(x_nchw, (0, 2, 3, 1)).astype(jnp.float32)
    xb = x.astype(jnp.bfloat16)
    w1, b1 = _fold_bn(params["conv1"], params["bn1"])
    w2, b2 = _fold_bn(params["conv2"], params["bn2"])

    def conv(inp, w_oihw, s, pad):
        w_hwio = jnp.transpose(w_oihw, (2, 3, 1, 0)).astype(jnp.bfloat16)
        return jax.lax.conv_general_dilated(
            inp, w_hwio, (s, s), [(pad, pad)] * 2,
            dimension_numbers=("NHWC", "HWIO", "NHWC"),
            preferred_element_type=jnp.float32)

    h1 = jax.nn.relu(conv(xb, w1, stride, 1) + b1)
    y2 = conv(h1.astype(jnp.bfloat16), w2, 1, 1) + b2
    if apply_downsample:
        wd, bd = _fold_bn(params["convd"], params["bnd"])
        skip = conv(xb, wd, stride, 0) + bd
    else:
        skip = xb.astype(jnp.float32)   # kernel carries the identity skip in bf16
    y = jax.nn.relu(y2 + skip)
    return jnp.transpose(y, (0, 3, 1, 2))


# ---------------------------------------------------------------------------
if __name__ == "__main__":
    key = jax.random.PRNGKey(0)
    kx1, kp1, kx2, kp2 = jax.random.split(key, 4)

    # Config 1: downsampling block (in=4, out=16, stride=2), NCHW input (2,4,16,16).
    N, Cin1, H, W = 2, 4, 16, 16
    Cout1, stride1 = 16, 2
    x1 = jax.random.normal(kx1, (N, Cin1, H, W), jnp.float32)
    p1 = make_basicblock_params(kp1, Cin1, Cout1, True)
    out1 = basic_block_forward(x1, p1, stride=stride1, apply_downsample=True)
    jax.block_until_ready(out1)
    ref1 = basicblock_ref(x1, p1, stride1, True)
    np.testing.assert_allclose(np.asarray(out1), np.asarray(ref1),
                               rtol=5e-3, atol=5e-3)

    # Config 2: identity-skip block (in=out=16, stride=1), NCHW input (2,16,16,16).
    Cin2, Cout2, stride2 = 16, 16, 1
    x2 = jax.random.normal(kx2, (N, Cin2, H, W), jnp.float32)
    p2 = make_basicblock_params(kp2, Cin2, Cout2, False)
    out2 = basic_block_forward(x2, p2, stride=stride2, apply_downsample=False)
    jax.block_until_ready(out2)
    ref2 = basicblock_ref(x2, p2, stride2, False)
    np.testing.assert_allclose(np.asarray(out2), np.asarray(ref2),
                               rtol=5e-3, atol=5e-3)

    print("KERNEL_OK")
</pallas_src>

<mosaic_0001>
module attributes {stable_mosaic.version = 11 : i64} {
  func.func @_basicblock_kernel(%arg0: i32, %arg1: memref<1x64x128xbf16, #tpu.memory_space<vmem>>, %arg2: memref<128x128xbf16, #tpu.memory_space<vmem>>, %arg3: memref<1x128xf32, #tpu.memory_space<vmem>>, %arg4: memref<3x384x128xbf16, #tpu.memory_space<vmem>>, %arg5: memref<128x128xbf16, #tpu.memory_space<vmem>>, %arg6: memref<1x128xf32, #tpu.memory_space<vmem>>, %arg7: memref<1x64x128xbf16, #tpu.memory_space<vmem>>, %arg8: memref<80x384xbf16, #tpu.memory_space<vmem>>) attributes {dimension_semantics = [#tpu.dimension_semantics<parallel>], iteration_bounds = array<i64: 2>, scalar_prefetch = 0 : i64, scratch_operands = 1 : i64, tpu.core_type = #tpu.core_type<tc>, window_params = [{transform_indices = @transform_0, window_bounds = array<i64: 1, 64, 128>}, {pipeline_mode = #tpu.pipeline_mode<synchronous>, transform_indices = @transform_1, window_bounds = array<i64: 128, 128>}, {pipeline_mode = #tpu.pipeline_mode<synchronous>, transform_indices = @transform_2, window_bounds = array<i64: 1, 128>}, {pipeline_mode = #tpu.pipeline_mode<synchronous>, transform_indices = @transform_3, window_bounds = array<i64: 3, 384, 128>}, {pipeline_mode = #tpu.pipeline_mode<synchronous>, transform_indices = @transform_4, window_bounds = array<i64: 128, 128>}, {pipeline_mode = #tpu.pipeline_mode<synchronous>, transform_indices = @transform_5, window_bounds = array<i64: 1, 128>}, {transform_indices = @transform_6, window_bounds = array<i64: 1, 64, 128>}]} {
    %cst = arith.constant 0.000000e+00 : bf16
    %0 = vector.broadcast %cst : bf16 to vector<8x384xbf16>
    %c0 = arith.constant 0 : index
    %c0_0 = arith.constant 0 : index
    %1 = vector.load %arg8[%c0, %c0_0] : memref<80x384xbf16, #tpu.memory_space<vmem>>, vector<8x384xbf16>
    tpu.vector_store %arg8[%c0, %c0_0], %0 {strides = array<i32>} : memref<80x384xbf16, #tpu.memory_space<vmem>>, vector<8x384xbf16>,
    %cst_1 = arith.constant 0.000000e+00 : bf16
    %2 = vector.broadcast %cst_1 : bf16 to vector<8x384xbf16>
    %c72 = arith.constant 72 : index
    %c0_2 = arith.constant 0 : index
    %3 = vector.load %arg8[%c72, %c0_2] : memref<80x384xbf16, #tpu.memory_space<vmem>>, vector<8x384xbf16>
    tpu.vector_store %arg8[%c72, %c0_2], %2 {strides = array<i32>} : memref<80x384xbf16, #tpu.memory_space<vmem>>, vector<8x384xbf16>,
    %4 = tpu.iota {dimensions = array<i32: 0>} : vector<64x1xi32>
    %c8_i32 = arith.constant 8 : i32
    %c0_i32 = arith.constant 0 : i32
    %5 = arith.cmpi eq, %c8_i32, %c0_i32 : i32
    %c1_i32 = arith.constant 1 : i32
    %6 = arith.select %5, %c1_i32, %c8_i32 : i32
    %7 = vector.broadcast %6 : i32 to vector<64x1xi32>
    %8 = arith.remsi %4, %7 : vector<64x1xi32>
    %c0_i32_3 = arith.constant 0 : i32
    %9 = vector.broadcast %c0_i32_3 : i32 to vector<64x1xi32>
    %10 = arith.cmpi ne, %8, %9 : vector<64x1xi32>
    %c0_i32_4 = arith.constant 0 : i32
    %11 = vector.broadcast %c0_i32_4 : i32 to vector<64x1xi32>
    %12 = arith.cmpi slt, %8, %11 : vector<64x1xi32>
    %c0_i32_5 = arith.constant 0 : i32
    %13 = arith.cmpi slt, %6, %c0_i32_5 : i32
    %14 = vector.broadcast %13 : i1 to vector<64x1xi1>
    %15 = vector.broadcast %14 : vector<64x1xi1> to vector<64x1xi1>
    %16 = arith.xori %12, %15 : vector<64x1xi1>
    %17 = arith.andi %16, %10 : vector<64x1xi1>
    %18 = vector.broadcast %6 : i32 to vector<64x1xi32>
    %19 = arith.addi %8, %18 : vector<64x1xi32>
    %20 = arith.select %17, %19, %8 : vector<64x1xi1>, vector<64x1xi32>
    %c0_i32_6 = arith.constant 0 : i32
    %c1_i32_7 = arith.constant 1 : i32
    %21 = arith.muli %c0_i32_6, %c1_i32_7 : i32
    %c0_i32_8 = arith.constant 0 : i32
    %22 = arith.addi %c0_i32_8, %21 : i32
    %c64_i32 = arith.constant 64 : i32
    %23 = arith.muli %22, %c64_i32 : i32
    %24 = tpu.assume_multiple %23, 64 : i32
    %c0_9 = arith.constant 0 : index
    %25 = arith.index_cast %24 : i32 to index
    %c0_10 = arith.constant 0 : index
    %26 = vector.load %arg1[%c0_9, %25, %c0_10] : memref<1x64x128xbf16, #tpu.memory_space<vmem>>, vector<1x64x128xbf16>
    %27 = vector.shape_cast %26 : vector<1x64x128xbf16> to vector<64x128xbf16>
    %c0_11 = arith.constant 0 : index
    %c0_12 = arith.constant 0 : index
    %28 = vector.load %arg2[%c0_11, %c0_12] : memref<128x128xbf16, #tpu.memory_space<vmem>>, vector<128x128xbf16>
    %cst_13 = arith.constant dense<0.000000e+00> : vector<64x128xf32>
    %29 = tpu.matmul %27, %28, %cst_13 {dimension_numbers = #tpu.dot_dimension_numbers<[1], [0], [0], [1], [0, 0, 1, 1], [], []>} : vector<64x128xbf16>, vector<128x128xbf16>, vector<64x128xf32> -> vector<64x128xf32>
    %c0_14 = arith.constant 0 : index
    %c0_15 = arith.constant 0 : index
    %30 = vector.load %arg3[%c0_14, %c0_15] : memref<1x128xf32, #tpu.memory_space<vmem>>, vector<1x128xf32>
    %31 = vector.broadcast %30 : vector<1x128xf32> to vector<64x128xf32>
    %32 = arith.addf %29, %31 : vector<64x128xf32>
    %cst_16 = arith.constant 0.000000e+00 : f32
    %33 = vector.broadcast %cst_16 : f32 to vector<64x128xf32>
    %34 = arith.maximumf %32, %33 : vector<64x128xf32>
    %c8_i32_17 = arith.constant 8 : i32
    %35 = arith.addi %24, %c8_i32_17 : i32
    %36 = tpu.assume_multiple %35, 8 : i32
    %37 = arith.truncf %34 : vector<64x128xf32> to vector<64x128xbf16>
    %38 = arith.index_cast %36 : i32 to index
    %c128 = arith.constant 128 : index
    %39 = vector.load %arg8[%38, %c128] : memref<80x384xbf16, #tpu.memory_space<vmem>>, vector<64x128xbf16>
    tpu.vector_store %arg8[%38, %c128], %37 {strides = array<i32>} : memref<80x384xbf16, #tpu.memory_space<vmem>>, vector<64x128xbf16>,
    %c0_i32_18 = arith.constant 0 : i32
    %40 = vector.broadcast %c0_i32_18 : i32 to vector<64x1xi32>
    %41 = arith.cmpi eq, %20, %40 : vector<64x1xi32>
    %c1_i32_19 = arith.constant 1 : i32
    %42 = tpu.dynamic_rotate %34 by %c1_i32_19 dim 0 : vector<64x128xf32>, i32 -> vector<64x128xf32>
    %cst_20 = arith.constant 0.000000e+00 : f32
    %43 = vector.shape_cast %41 : vector<64x1xi1> to vector<64x1xi1>
    %44 = vector.broadcast %43 : vector<64x1xi1> to vector<64x128xi1>
    %45 = vector.broadcast %cst_20 : f32 to vector<64x128xf32>
    %46 = arith.select %44, %45, %42 : vector<64x128xi1>, vector<64x128xf32>
    %47 = arith.truncf %46 : vector<64x128xf32> to vector<64x128xbf16>
    %48 = arith.index_cast %36 : i32 to index
    %c0_21 = arith.constant 0 : index
    %49 = vector.load %arg8[%48, %c0_21] : memref<80x384xbf16, #tpu.memory_space<vmem>>, vector<64x128xbf16>
    tpu.vector_store %arg8[%48, %c0_21], %47 {strides = array<i32>} : memref<80x384xbf16, #tpu.memory_space<vmem>>, vector<64x128xbf16>,
    %c7_i32 = arith.constant 7 : i32
    %50 = vector.broadcast %c7_i32 : i32 to vector<64x1xi32>
    %51 = arith.cmpi eq, %20, %50 : vector<64x1xi32>
    %c63_i32 = arith.constant 63 : i32
    %52 = tpu.dynamic_rotate %34 by %c63_i32 dim 0 : vector<64x128xf32>, i32 -> vector<64x128xf32>
    %cst_22 = arith.constant 0.000000e+00 : f32
    %53 = vector.shape_cast %51 : vector<64x1xi1> to vector<64x1xi1>
    %54 = vector.broadcast %53 : vector<64x1xi1> to vector<64x128xi1>
    %55 = vector.broadcast %cst_22 : f32 to vector<64x128xf32>
    %56 = arith.select %54, %55, %52 : vector<64x128xi1>, vector<64x128xf32>
    %57 = arith.truncf %56 : vector<64x128xf32> to vector<64x128xbf16>
    %58 = arith.index_cast %36 : i32 to index
    %c256 = arith.constant 256 : index
    %59 = vector.load %arg8[%58, %c256] : memref<80x384xbf16, #tpu.memory_space<vmem>>, vector<64x128xbf16>
    tpu.vector_store %arg8[%58, %c256], %57 {strides = array<i32>} : memref<80x384xbf16, #tpu.memory_space<vmem>>, vector<64x128xbf16>,
    %c1_i32_23 = arith.constant 1 : i32
    %c0_i32_24 = arith.constant 0 : i32
    %c1_i32_25 = arith.constant 1 : i32
    %60 = arith.muli %c0_i32_24, %c1_i32_25 : i32
    %c0_i32_26 = arith.constant 0 : i32
    %61 = arith.addi %c0_i32_26, %60 : i32
    %c64_i32_27 = arith.constant 64 : i32
    %62 = arith.muli %61, %c64_i32_27 : i32
    %63 = tpu.assume_multiple %62, 64 : i32
    %c0_28 = arith.constant 0 : index
    %64 = arith.index_cast %63 : i32 to index
    %c0_29 = arith.constant 0 : index
    %65 = vector.load %arg1[%c0_28, %64, %c0_29] : memref<1x64x128xbf16, #tpu.memory_space<vmem>>, vector<1x64x128xbf16>
    %66 = vector.shape_cast %65 : vector<1x64x128xbf16> to vector<64x128xbf16>
    %c0_30 = arith.constant 0 : index
    %c0_31 = arith.constant 0 : index
    %67 = vector.load %arg5[%c0_30, %c0_31] : memref<128x128xbf16, #tpu.memory_space<vmem>>, vector<128x128xbf16>
    %cst_32 = arith.constant dense<0.000000e+00> : vector<64x128xf32>
    %68 = tpu.matmul %66, %67, %cst_32 {dimension_numbers = #tpu.dot_dimension_numbers<[1], [0], [0], [1], [0, 0, 1, 1], [], []>} : vector<64x128xbf16>, vector<128x128xbf16>, vector<64x128xf32> -> vector<64x128xf32>
    %c0_i32_33 = arith.constant 0 : i32
    %69 = arith.addi %63, %c0_i32_33 : i32
    %70 = tpu.assume_multiple %69, 8 : i32
    %71 = arith.index_cast %70 : i32 to index
    %c0_34 = arith.constant 0 : index
    %72 = vector.load %arg8[%71, %c0_34] : memref<80x384xbf16, #tpu.memory_space<vmem>>, vector<64x384xbf16>
    %c0_35 = arith.constant 0 : index
    %c0_36 = arith.constant 0 : index
    %c0_37 = arith.constant 0 : index
    %73 = vector.load %arg4[%c0_35, %c0_36, %c0_37] : memref<3x384x128xbf16, #tpu.memory_space<vmem>>, vector<1x384x128xbf16>
    %74 = vector.shape_cast %73 : vector<1x384x128xbf16> to vector<384x128xbf16>
    %cst_38 = arith.constant dense<0.000000e+00> : vector<64x128xf32>
    %75 = tpu.matmul %72, %74, %cst_38 {dimension_numbers = #tpu.dot_dimension_numbers<[1], [0], [0], [1], [0, 0, 1, 1], [], []>} : vector<64x384xbf16>, vector<384x128xbf16>, vector<64x128xf32> -> vector<64x128xf32>
    %76 = arith.addf %68, %75 : vector<64x128xf32>
    %c8_i32_39 = arith.constant 8 : i32
    %77 = arith.addi %63, %c8_i32_39 : i32
    %78 = tpu.assume_multiple %77, 8 : i32
    %79 = arith.index_cast %78 : i32 to index
    %c0_40 = arith.constant 0 : index
    %80 = vector.load %arg8[%79, %c0_40] : memref<80x384xbf16, #tpu.memory_space<vmem>>, vector<64x384xbf16>
    %c1 = arith.constant 1 : index
    %c0_41 = arith.constant 0 : index
    %c0_42 = arith.constant 0 : index
    %81 = vector.load %arg4[%c1, %c0_41, %c0_42] : memref<3x384x128xbf16, #tpu.memory_space<vmem>>, vector<1x384x128xbf16>
    %82 = vector.shape_cast %81 : vector<1x384x128xbf16> to vector<384x128xbf16>
    %cst_43 = arith.constant dense<0.000000e+00> : vector<64x128xf32>
    %83 = tpu.matmul %80, %82, %cst_43 {dimension_numbers = #tpu.dot_dimension_numbers<[1], [0], [0], [1], [0, 0, 1, 1], [], []>} : vector<64x384xbf16>, vector<384x128xbf16>, vector<64x128xf32> -> vector<64x128xf32>
    %84 = arith.addf %76, %83 : vector<64x128xf32>
    %c16_i32 = arith.constant 16 : i32
    %85 = arith.addi %63, %c16_i32 : i32
    %86 = tpu.assume_multiple %85, 8 : i32
    %87 = arith.index_cast %86 : i32 to index
    %c0_44 = arith.constant 0 : index
    %88 = vector.load %arg8[%87, %c0_44] : memref<80x384xbf16, #tpu.memory_space<vmem>>, vector<64x384xbf16>
    %c2 = arith.constant 2 : index
    %c0_45 = arith.constant 0 : index
    %c0_46 = arith.constant 0 : index
    %89 = vector.load %arg4[%c2, %c0_45, %c0_46] : memref<3x384x128xbf16, #tpu.memory_space<vmem>>, vector<1x384x128xbf16>
    %90 = vector.shape_cast %89 : vector<1x384x128xbf16> to vector<384x128xbf16>
    %cst_47 = arith.constant dense<0.000000e+00> : vector<64x128xf32>
    %91 = tpu.matmul %88, %90, %cst_47 {dimension_numbers = #tpu.dot_dimension_numbers<[1], [0], [0], [1], [0, 0, 1, 1], [], []>} : vector<64x384xbf16>, vector<384x128xbf16>, vector<64x128xf32> -> vector<64x128xf32>
    %92 = arith.addf %84, %91 : vector<64x128xf32>
    %c0_48 = arith.constant 0 : index
    %c0_49 = arith.constant 0 : index
    %93 = vector.load %arg6[%c0_48, %c0_49] : memref<1x128xf32, #tpu.memory_space<vmem>>, vector<1x128xf32>
    %94 = vector.broadcast %93 : vector<1x128xf32> to vector<64x128xf32>
    %95 = arith.addf %92, %94 : vector<64x128xf32>
    %cst_50 = arith.constant 0.000000e+00 : f32
    %96 = vector.broadcast %cst_50 : f32 to vector<64x128xf32>
    %97 = arith.maximumf %95, %96 : vector<64x128xf32>
    %98 = arith.truncf %97 : vector<64x128xf32> to vector<64x128xbf16>
    %c0_51 = arith.constant 0 : index
    %99 = arith.index_cast %63 : i32 to index
    %c0_52 = arith.constant 0 : index
    %100 = vector.load %arg7[%c0_51, %99, %c0_52] : memref<1x64x128xbf16, #tpu.memory_space<vmem>>, vector<1x64x128xbf16>
    %101 = vector.shape_cast %100 : vector<1x64x128xbf16> to vector<64x128xbf16>
    %102 = vector.shape_cast %98 : vector<64x128xbf16> to vector<1x64x128xbf16>
    tpu.vector_store %arg7[%c0_51, %99, %c0_52], %102 {strides = array<i32>} : memref<1x64x128xbf16, #tpu.memory_space<vmem>>, vector<1x64x128xbf16>,
    %c1_i32_53 = arith.constant 1 : i32
    return
  }
  func.func @transform_0(%arg0: i32) -> (i32, i32, i32) {
    %c0_i32 = arith.constant 0 : i32
    %c0_i32_0 = arith.constant 0 : i32
    %c0_i32_1 = arith.constant 0 : i32
    return %arg0, %c0_i32, %c0_i32_0 : i32, i32, i32
  }
  func.func @transform_1(%arg0: i32) -> (i32, i32) {
    %c0_i32 = arith.constant 0 : i32
    %c0_i32_0 = arith.constant 0 : i32
    %c0_i32_1 = arith.constant 0 : i32
    return %c0_i32, %c0_i32_0 : i32, i32
  }
  func.func @transform_2(%arg0: i32) -> (i32, i32) {
    %c0_i32 = arith.constant 0 : i32
    %c0_i32_0 = arith.constant 0 : i32
    %c0_i32_1 = arith.constant 0 : i32
    return %c0_i32, %c0_i32_0 : i32, i32
  }
  func.func @transform_3(%arg0: i32) -> (i32, i32, i32) {
    %c0_i32 = arith.constant 0 : i32
    %c0_i32_0 = arith.constant 0 : i32
    %c0_i32_1 = arith.constant 0 : i32
    %c0_i32_2 = arith.constant 0 : i32
    return %c0_i32, %c0_i32_0, %c0_i32_1 : i32, i32, i32
  }
  func.func @transform_4(%arg0: i32) -> (i32, i32) {
    %c0_i32 = arith.constant 0 : i32
    %c0_i32_0 = arith.constant 0 : i32
    %c0_i32_1 = arith.constant 0 : i32
    return %c0_i32, %c0_i32_0 : i32, i32
  }
  func.func @transform_5(%arg0: i32) -> (i32, i32) {
    %c0_i32 = arith.constant 0 : i32
    %c0_i32_0 = arith.constant 0 : i32
    %c0_i32_1 = arith.constant 0 : i32
    return %c0_i32, %c0_i32_0 : i32, i32
  }
  func.func @transform_6(%arg0: i32) -> (i32, i32, i32) {
    %c0_i32 = arith.constant 0 : i32
    %c0_i32_0 = arith.constant 0 : i32
    %c0_i32_1 = arith.constant 0 : i32
    return %arg0, %c0_i32, %c0_i32_0 : i32, i32, i32
  }
}

</mosaic_0001>

<llo_original>
// kernel: basic_block_forward.1
$region0: #{basic_block_forward.1}
  #allocation0 [shape = 'u32[]', space=smem, size = 0x4, offset = 0x4, fixed_abs, tag = 'smem constant byte address 0x4 - core index']
  #allocation1 [shape = 'u32[144,128]{1,0:T(1,128)}', space=vmem, size = 0x12000, scoped, tag = 'internal scratch']
  #allocation2 [shape = 'bf16[80,384]{1,0:T(8,128)(2,1)}', space=vmem, size = 0xf000, scoped, tag = 'scratch operand']
  %s0 = inlined_call_operand.vmem [shape: bf16[2,64,128], index: 0, kind: input, shape index: {}]
  %s1 = inlined_call_operand.vmem [shape: bf16[128,128], index: 1, kind: input, shape index: {}]
  %s2 = inlined_call_operand.vmem [shape: f32[1,128], index: 2, kind: input, shape index: {}]
  %s3 = inlined_call_operand.vmem [shape: bf16[3,384,128], index: 3, kind: input, shape index: {}]
  %s4 = inlined_call_operand.vmem [shape: bf16[128,128], index: 4, kind: input, shape index: {}]
  %s5 = inlined_call_operand.vmem [shape: f32[1,128], index: 5, kind: input, shape index: {}]
  %s6 = inlined_call_operand.vmem [shape: bf16[2,64,128], index: 6, kind: output, shape index: {}]
  %s7 = sld [smem:[#allocation0]]
  $region57: #{basic_block_forward.1} parent=0
    _
  %s9 = ssub.s32 1, %s7
  %s10 = scalar_select 0, %s9, %s7
  loop: start=0, step=1, limit=4
  $region2: #{basic_block_forward.1} parent=0 // loop_pre_header
    _
  $region3: #{basic_block_forward.1} parent=0 // loop_header
    %s12 = sphi 0, %s16
    %p13 = scmp.ge.s32.totalorder %s12, 4
    %s22 = sphi 0, %s24
    %s25 = sphi 0, %s22
    %s26 = sphi 0, %s25
    %s42 = sphi 0, %s26
    %s46 = sphi 0, %s46
    %s48 = sphi 0, %s46
    %s49 = sphi 0, %s48
    %s63 = sphi 0, %s49
    %s67 = sphi 0, %s67
    %s69 = sphi 0, %s67
    %s70 = sphi 0, %s69
    %s84 = sphi 0, %s70
    %s88 = sphi 0, %s88
    %s90 = sphi 0, %s88
    %s91 = sphi 0, %s90
    %s105 = sphi 0, %s91
    %s109 = sphi 0, %s109
    %s111 = sphi 0, %s109
    %s112 = sphi 0, %s111
    %s126 = sphi 0, %s112
    %s130 = sphi 0, %s130
    %s132 = sphi 0, %s130
    %s133 = sphi 0, %s132
    %s147 = sphi 0, %s133
    %s153 = sphi 0, %s155
    %s156 = sphi 0, %s153
    %s157 = sphi 0, %s156
    %s173 = sphi 0, %s157
  $region4: #{basic_block_forward.1} parent=0 // loop_header_branch
    %15 = sbr.rel (%p13) target = $region8
  $region5: #{basic_block_forward.1} parent=0 // loop_body
    %s17 = ssub.s32 %s12, 1
    %s18 = ssub.s32 %s12, 2
    %s19 = sadd.s32 %s12, 1
    %s20 = ssub.s32 %s12, %s19
    %p21 = scmp.eq.s32.totalorder %s20, 0
    %s23 = sadd.s32 %s22, 1
    %s24 = scalar_select %p21, %s22, %s23
    %p27 = pneg %p21
    %p28 = scmp.eq.s32.totalorder %s12, 1
    %p29 = por %p27, %p28
    %p30 = scmp.ne.s32.totalorder %s22, %s25
    %p31 = scmp.eq.s32.totalorder %s12, 0
    %p32 = por %p30, %p31
    %p33 = scmp.ne.s32.totalorder %s22, %s25
    %p34 = scmp.eq.s32.totalorder %s17, 1
    %p35 = por %p33, %p34
    %p36 = scmp.ne.s32.totalorder %s25, %s26
    %p37 = scmp.eq.s32.totalorder %s17, 0
    %p38 = por %p36, %p37
    %p39 = scmp.ne.s32.totalorder %s25, %s26
    %p40 = scmp.eq.s32.totalorder %s18, 1
    %p41 = por %p39, %p40
    %p43 = scmp.ne.s32.totalorder %s26, %s42
    %p44 = scmp.eq.s32.totalorder %s18, 0
    %p45 = por %p43, %p44
    %s47 = sadd.s32 %s46, 1
    %p50 = scmp.eq.s32.totalorder %s12, 1
    %p51 = scmp.ne.s32.totalorder %s46, %s48
    %p52 = scmp.eq.s32.totalorder %s12, 0
    %p53 = por %p51, %p52
    %p54 = scmp.ne.s32.totalorder %s46, %s48
    %p55 = scmp.eq.s32.totalorder %s17, 1
    %p56 = por %p54, %p55
    %p57 = scmp.ne.s32.totalorder %s48, %s49
    %p58 = scmp.eq.s32.totalorder %s17, 0
    %p59 = por %p57, %p58
    %p60 = scmp.ne.s32.totalorder %s48, %s49
    %p61 = scmp.eq.s32.totalorder %s18, 1
    %p62 = por %p60, %p61
    %p64 = scmp.ne.s32.totalorder %s49, %s63
    %p65 = scmp.eq.s32.totalorder %s18, 0
    %p66 = por %p64, %p65
    %s68 = sadd.s32 %s67, 1
    %p71 = scmp.eq.s32.totalorder %s12, 1
    %p72 = scmp.ne.s32.totalorder %s67, %s69
    %p73 = scmp.eq.s32.totalorder %s12, 0
    %p74 = por %p72, %p73
    %p75 = scmp.ne.s32.totalorder %s67, %s69
    %p76 = scmp.eq.s32.totalorder %s17, 1
    %p77 = por %p75, %p76
    %p78 = scmp.ne.s32.totalorder %s69, %s70
    %p79 = scmp.eq.s32.totalorder %s17, 0
    %p80 = por %p78, %p79
    %p81 = scmp.ne.s32.totalorder %s69, %s70
    %p82 = scmp.eq.s32.totalorder %s18, 1
    %p83 = por %p81, %p82
    %p85 = scmp.ne.s32.totalorder %s70, %s84
    %p86 = scmp.eq.s32.totalorder %s18, 0
    %p87 = por %p85, %p86
    %s89 = sadd.s32 %s88, 1
    %p92 = scmp.eq.s32.totalorder %s12, 1
    %p93 = scmp.ne.s32.totalorder %s88, %s90
    %p94 = scmp.eq.s32.totalorder %s12, 0
    %p95 = por %p93, %p94
    %p96 = scmp.ne.s32.totalorder %s88, %s90
    %p97 = scmp.eq.s32.totalorder %s17, 1
    %p98 = por %p96, %p97
    %p99 = scmp.ne.s32.totalorder %s90, %s91
    %p100 = scmp.eq.s32.totalorder %s17, 0
    %p101 = por %p99, %p100
    %p102 = scmp.ne.s32.totalorder %s90, %s91
    %p103 = scmp.eq.s32.totalorder %s18, 1
    %p104 = por %p102, %p103
    %p106 = scmp.ne.s32.totalorder %s91, %s105
    %p107 = scmp.eq.s32.totalorder %s18, 0
    %p108 = por %p106, %p107
    %s110 = sadd.s32 %s109, 1
    %p113 = scmp.eq.s32.totalorder %s12, 1
    %p114 = scmp.ne.s32.totalorder %s109, %s111
    %p115 = scmp.eq.s32.totalorder %s12, 0
    %p116 = por %p114, %p115
    %p117 = scmp.ne.s32.totalorder %s109, %s111
    %p118 = scmp.eq.s32.totalorder %s17, 1
    %p119 = por %p117, %p118
    %p120 = scmp.ne.s32.totalorder %s111, %s112
    %p121 = scmp.eq.s32.totalorder %s17, 0
    %p122 = por %p120, %p121
    %p123 = scmp.ne.s32.totalorder %s111, %s112
    %p124 = scmp.eq.s32.totalorder %s18, 1
    %p125 = por %p123, %p124
    %p127 = scmp.ne.s32.totalorder %s112, %s126
    %p128 = scmp.eq.s32.totalorder %s18, 0
    %p129 = por %p127, %p128
    %s131 = sadd.s32 %s130, 1
    %p134 = scmp.eq.s32.totalorder %s12, 1
    %p135 = scmp.ne.s32.totalorder %s130, %s132
    %p136 = scmp.eq.s32.totalorder %s12, 0
    %p137 = por %p135, %p136
    %p138 = scmp.ne.s32.totalorder %s130, %s132
    %p139 = scmp.eq.s32.totalorder %s17, 1
    %p140 = por %p138, %p139
    %p141 = scmp.ne.s32.totalorder %s132, %s133
    %p142 = scmp.eq.s32.totalorder %s17, 0
    %p143 = por %p141, %p142
    %p144 = scmp.ne.s32.totalorder %s132, %s133
    %p145 = scmp.eq.s32.totalorder %s18, 1
    %p146 = por %p144, %p145
    %p148 = scmp.ne.s32.totalorder %s133, %s147
    %p149 = scmp.eq.s32.totalorder %s18, 0
    %p150 = por %p148, %p149
    %s151 = ssub.s32 %s12, %s19
    %p152 = scmp.eq.s32.totalorder %s151, 0
    %s154 = sadd.s32 %s153, 1
    %s155 = scalar_select %p152, %s153, %s154
    %p158 = pneg %p152
    %p159 = scmp.eq.s32.totalorder %s12, 1
    %p160 = por %p158, %p159
    %p161 = scmp.ne.s32.totalorder %s153, %s156
    %p162 = scmp.eq.s32.totalorder %s12, 0
    %p163 = por %p161, %p162
    %p164 = scmp.ne.s32.totalorder %s153, %s156
    %p165 = scmp.eq.s32.totalorder %s17, 1
    %p166 = por %p164, %p165
    %p167 = scmp.ne.s32.totalorder %s156, %s157
    %p168 = scmp.eq.s32.totalorder %s17, 0
    %p169 = por %p167, %p168
    %p170 = scmp.ne.s32.totalorder %s156, %s157
    %p171 = scmp.eq.s32.totalorder %s18, 1
    %p172 = por %p170, %p171
    %p174 = scmp.ne.s32.totalorder %s157, %s173
    %p175 = scmp.eq.s32.totalorder %s18, 0
    %p176 = por %p174, %p175
    %p177 = scmp.le.s32.totalorder 1, %s12
    %p178 = scmp.lt.s32.totalorder %s12, 3
    %p179 = pnand %p177, %p178
    %p180 = pneg %p179
    // Predicated region
    $region9: #{basic_block_forward.1} parent=5 // pred_check
      _
    $region10: #{basic_block_forward.1} parent=5 // pred_check_branch
      %182 = sbr.rel (%p179) target = $region12
    $region11: #{basic_block_forward.1} parent=5 // pred_region
      %s183 = ssub.s32 %s12, 1
      // Predicated region
      $region13: #{basic_block_forward.1} parent=11 // pred_check
        %p184 = pneg %p59
      $region14: #{basic_block_forward.1} parent=11 // pred_check_branch
        %186 = sbr.rel (%p184) target = $region16
      $region15: #{basic_block_forward.1} parent=11 // pred_region
        _
      $region16: #{basic_block_forward.1} parent=11 // pred_fallthru
        _
      // Predicated region
      $region17: #{basic_block_forward.1} parent=11 // pred_check
        %p187 = pneg %p80
      $region18: #{basic_block_forward.1} parent=11 // pred_check_branch
        %189 = sbr.rel (%p187) target = $region20
      $region19: #{basic_block_forward.1} parent=11 // pred_region
        _
      $region20: #{basic_block_forward.1} parent=11 // pred_fallthru
        _
      // Predicated region
      $region21: #{basic_block_forward.1} parent=11 // pred_check
        %p190 = pneg %p101
      $region22: #{basic_block_forward.1} parent=11 // pred_check_branch
        %192 = sbr.rel (%p190) target = $region24
      $region23: #{basic_block_forward.1} parent=11 // pred_region
        _
      $region24: #{basic_block_forward.1} parent=11 // pred_fallthru
        _
      // Predicated region
      $region25: #{basic_block_forward.1} parent=11 // pred_check
        %p193 = pneg %p122
      $region26: #{basic_block_forward.1} parent=11 // pred_check_branch
        %195 = sbr.rel (%p193) target = $region28
      $region27: #{basic_block_forward.1} parent=11 // pred_region
        _
      $region28: #{basic_block_forward.1} parent=11 // pred_fallthru
        _
      // Predicated region
      $region29: #{basic_block_forward.1} parent=11 // pred_check
        %p196 = pneg %p143
      $region30: #{basic_block_forward.1} parent=11 // pred_check_branch
        %198 = sbr.rel (%p196) target = $region32
      $region31: #{basic_block_forward.1} parent=11 // pred_region
        _
      $region32: #{basic_block_forward.1} parent=11 // pred_fallthru
        _
    $region12: #{basic_block_forward.1} parent=5 // pred_fallthru
      _
    %p199 = scmp.lt.s32.totalorder %s12, 2
    // Predicated region
    $region33: #{basic_block_forward.1} parent=5 // pred_check
      %p200 = pneg %p199
    $region34: #{basic_block_forward.1} parent=5 // pred_check_branch
      %202 = sbr.rel (%p200) target = $region36
    $region35: #{basic_block_forward.1} parent=5 // pred_region
      // Predicated region
      $region37: #{basic_block_forward.1} parent=35 // pred_check
        %p203 = pneg %p32
      $region38: #{basic_block_forward.1} parent=35 // pred_check_branch
        %205 = sbr.rel (%p203) target = $region40
      $region39: #{basic_block_forward.1} parent=35 // pred_region
        %p206 = scmp.lt.s32.totalorder %s12, 1
        %s207 = scalar_select %p206, %s12, 1
        %s208 = smul.addr %s207, 8
        %s209 = smul.addr %s208, 4
        %s210 = scalar_lea.vmem %s0, %s209
      $region40: #{basic_block_forward.1} parent=35 // pred_fallthru
        _
    $region36: #{basic_block_forward.1} parent=5 // pred_fallthru
      _
    %p211 = scmp.le.s32.totalorder 1, %s12
    %p212 = scmp.lt.s32.totalorder %s12, 3
    %p213 = pnand %p211, %p212
    %p214 = pneg %p213
    // Predicated region
    $region41: #{basic_block_forward.1} parent=5 // pred_check
      _
    $region42: #{basic_block_forward.1} parent=5 // pred_check_branch
      %216 = sbr.rel (%p213) target = $region44
    $region43: #{basic_block_forward.1} parent=5 // pred_region
      %s217 = ssub.s32 %s12, 1
      %p218 = scmp.lt.s32.totalorder %s17, 1
      %s219 = scalar_select %p218, %s17, 1
      %s220 = smul.addr %s219, 8
      %s221 = smul.addr %s220, 4
      %s222 = scalar_lea.vmem %s0, %s221
      %p223 = pneg %p38
      %p224 = pneg %p35
      %p225 = pneg %p59
      %p226 = pneg %p56
      %p227 = pneg %p80
      %p228 = pneg %p77
      %p229 = pneg %p101
      %p230 = pneg %p98
      %p231 = pneg %p122
      %p232 = pneg %p119
      %p233 = pneg %p143
      %p234 = pneg %p140
      %p235 = pneg %p169
      %p236 = pneg %p166
      %p237 = scmp.lt.s32.totalorder %s17, 1
      %s238 = scalar_select %p237, %s17, 1
      %s239 = smul.addr %s238, 8
      %s240 = smul.addr %s239, 4
      %s241 = scalar_lea.vmem %s6, %s240
      %p242 = scmp.lt.s32.totalorder %s17, 1
      %s243 = scalar_select %p242, %s17, 1
      %s244 = smul.addr %s243, 8
      %s245 = smul.addr %s244, 4
      %s246 = scalar_lea.vmem %s0, %s245
      %p247 = scmp.lt.s32.totalorder %s17, 1
      %s248 = scalar_select %p247, %s17, 1
      %s249 = smul.addr %s248, 8
      %s250 = smul.addr %s249, 4
      %s251 = scalar_lea.vmem %s6, %s250
      %253 = vst [vmem:[#allocation2] sm:$0xff] 0
      %254 = vst [vmem:[#allocation2 + $0x8] sm:$0xf] 0
      %255 = vst [vmem:[#allocation2 + $0x6c] sm:$0xff] 0
      %256 = vst [vmem:[#allocation2 + $0x74] sm:$0xf] 0
      %v257 = vlaneseq
      %v258 = vshrl.u32 %v257, 7
      %v259 = vadd.s32 %v258, 8
      %v260 = vadd.s32 %v258, 16
      %v261 = vadd.s32 %v258, 24
      %v262 = vadd.s32 %v258, 32
      %v263 = vadd.s32 %v258, 40
      %v264 = vadd.s32 %v258, 48
      %v265 = vadd.s32 %v258, 56
      %vm266 = vcmp.lt.s32.totalorder %v258, 0
      %v267 = vsub.s32 0, %v258
      %v268 = vsel %vm266, %v267, %v258
      %v269 = vshrl.u32 %v268, 3
      %v270 = vand.u32 %v268, 7
      %v271 = vsub.s32 0, %v270
      %v272 = vsel %vm266, %v271, %v270
      %vm273 = vcmp.lt.s32.totalorder %v259, 0
      %v274 = vsub.s32 0, %v259
      %v275 = vsel %vm273, %v274, %v259
      %v276 = vshrl.u32 %v275, 3
      %v277 = vand.u32 %v275, 7
      %v278 = vsub.s32 0, %v277
      %v279 = vsel %vm273, %v278, %v277
      %vm280 = vcmp.lt.s32.totalorder %v260, 0
      %v281 = vsub.s32 0, %v260
      %v282 = vsel %vm280, %v281, %v260
      %v283 = vshrl.u32 %v282, 3
      %v284 = vand.u32 %v282, 7
      %v285 = vsub.s32 0, %v284
      %v286 = vsel %vm280, %v285, %v284
      %vm287 = vcmp.lt.s32.totalorder %v261, 0
      %v288 = vsub.s32 0, %v261
      %v289 = vsel %vm287, %v288, %v261
      %v290 = vshrl.u32 %v289, 3
      %v291 = vand.u32 %v289, 7
      %v292 = vsub.s32 0, %v291
      %v293 = vsel %vm287, %v292, %v291
      %vm294 = vcmp.lt.s32.totalorder %v262, 0
      %v295 = vsub.s32 0, %v262
      %v296 = vsel %vm294, %v295, %v262
      %v297 = vshrl.u32 %v296, 3
      %v298 = vand.u32 %v296, 7
      %v299 = vsub.s32 0, %v298
      %v300 = vsel %vm294, %v299, %v298
      %vm301 = vcmp.lt.s32.totalorder %v263, 0
      %v302 = vsub.s32 0, %v263
      %v303 = vsel %vm301, %v302, %v263
      %v304 = vshrl.u32 %v303, 3
      %v305 = vand.u32 %v303, 7
      %v306 = vsub.s32 0, %v305
      %v307 = vsel %vm301, %v306, %v305
      %vm308 = vcmp.lt.s32.totalorder %v264, 0
      %v309 = vsub.s32 0, %v264
      %v310 = vsel %vm308, %v309, %v264
      %v311 = vshrl.u32 %v310, 3
      %v312 = vand.u32 %v310, 7
      %v313 = vsub.s32 0, %v312
      %v314 = vsel %vm308, %v313, %v312
      %vm315 = vcmp.lt.s32.totalorder %v265, 0
      %v316 = vsub.s32 0, %v265
      %v317 = vsel %vm315, %v316, %v265
      %v318 = vshrl.u32 %v317, 3
      %v319 = vand.u32 %v317, 7
      %v320 = vsub.s32 0, %v319
      %v321 = vsel %vm315, %v320, %v319
      %vm322 = vcmp.ne.s32.totalorder %v272, 0
      %vm323 = vcmp.ne.s32.totalorder %v279, 0
      %vm324 = vcmp.ne.s32.totalorder %v286, 0
      %vm325 = vcmp.ne.s32.totalorder %v293, 0
      %vm326 = vcmp.ne.s32.totalorder %v300, 0
      %vm327 = vcmp.ne.s32.totalorder %v307, 0
      %vm328 = vcmp.ne.s32.totalorder %v314, 0
      %vm329 = vcmp.ne.s32.totalorder %v321, 0
      %vm330 = vcmp.lt.s32.totalorder %v272, 0
      %vm331 = vcmp.lt.s32.totalorder %v279, 0
      %vm332 = vcmp.lt.s32.totalorder %v286, 0
      %vm333 = vcmp.lt.s32.totalorder %v293, 0
      %vm334 = vcmp.lt.s32.totalorder %v300, 0
      %vm335 = vcmp.lt.s32.totalorder %v307, 0
      %vm336 = vcmp.lt.s32.totalorder %v314, 0
      %vm337 = vcmp.lt.s32.totalorder %v321, 0
      %vm338 = vmand %vm330, %vm322
      %vm339 = vmand %vm331, %vm323
      %vm340 = vmand %vm332, %vm324
      %vm341 = vmand %vm333, %vm325
      %vm342 = vmand %vm334, %vm326
      %vm343 = vmand %vm335, %vm327
      %vm344 = vmand %vm336, %vm328
      %vm345 = vmand %vm337, %vm329
      %v346 = vadd.s32 %v272, 8
      %v347 = vadd.s32 %v279, 8
      %v348 = vadd.s32 %v286, 8
      %v349 = vadd.s32 %v293, 8
      %v350 = vadd.s32 %v300, 8
      %v351 = vadd.s32 %v307, 8
      %v352 = vadd.s32 %v314, 8
      %v353 = vadd.s32 %v321, 8
      %v354 = vsel %vm338, %v346, %v272
      %v355 = vsel %vm339, %v347, %v279
      %v356 = vsel %vm340, %v348, %v286
      %v357 = vsel %vm341, %v349, %v293
      %v358 = vsel %vm342, %v350, %v300
      %v359 = vsel %vm343, %v351, %v307
      %v360 = vsel %vm344, %v352, %v314
      %v361 = vsel %vm345, %v353, %v321
      %v362 = vld [vmem:[%s246] sm:$0xf]
      %v363 = vld [vmem:[%s246 + $0x4] sm:$0xf]
      %v364 = vld [vmem:[%s246 + $0x8] sm:$0xf]
      %v365 = vld [vmem:[%s246 + $0xc] sm:$0xf]
      %v366 = vld [vmem:[%s246 + $0x10] sm:$0xf]
      %v367 = vld [vmem:[%s246 + $0x14] sm:$0xf]
      %v368 = vld [vmem:[%s246 + $0x18] sm:$0xf]
      %v369 = vld [vmem:[%s246 + $0x1c] sm:$0xf]
      %v370 = vld [vmem:[%s1] sm:$0xf]
      %v371 = vld [vmem:[%s1 + $0x4] sm:$0xf]
      %v372 = vld [vmem:[%s1 + $0x8] sm:$0xf]
      %v373 = vld [vmem:[%s1 + $0xc] sm:$0xf]
      %v374 = vld [vmem:[%s1 + $0x10] sm:$0xf]
      %v375 = vld [vmem:[%s1 + $0x14] sm:$0xf]
      %v376 = vld [vmem:[%s1 + $0x18] sm:$0xf]
      %v377 = vld [vmem:[%s1 + $0x1c] sm:$0xf]
      %v378 = vld [vmem:[%s1 + $0x20] sm:$0xf]
      %v379 = vld [vmem:[%s1 + $0x24] sm:$0xf]
      %v380 = vld [vmem:[%s1 + $0x28] sm:$0xf]
      %v381 = vld [vmem:[%s1 + $0x2c] sm:$0xf]
      %v382 = vld [vmem:[%s1 + $0x30] sm:$0xf]
      %v383 = vld [vmem:[%s1 + $0x34] sm:$0xf]
      %v384 = vld [vmem:[%s1 + $0x38] sm:$0xf]
      %v385 = vld [vmem:[%s1 + $0x3c] sm:$0xf]
      %v386 = vld [vmem:[%s2] sm:$0x1]
      %v388 = vlaneseq
      %v389 = vshrl.u32 %v388, 7
      %v390 = vsub.s32 0, %v389
      %v391 = vrot.slane %v386, %v390
      %v401 = vunpack.c.l.b16 %v362
      %v402 = vunpack.c.l.b16 %v363
      %v403 = vunpack.c.l.b16 %v364
      %v404 = vunpack.c.l.b16 %v365
      %v405 = vunpack.c.l.b16 %v366
      %v406 = vunpack.c.l.b16 %v367
      %v407 = vunpack.c.l.b16 %v368
      %v408 = vunpack.c.l.b16 %v369
      %v409 = vpack.c.b16 %v402, %v401
      %v410 = vpack.c.b16 %v404, %v403
      %v411 = vpack.c.b16 %v406, %v405
      %v412 = vpack.c.b16 %v408, %v407
      %v433 = vunpack.c.l.b16 %v370
      %v434 = vunpack.c.l.b16 %v371
      %v435 = vunpack.c.l.b16 %v372
      %v436 = vunpack.c.l.b16 %v373
      %v437 = vunpack.c.l.b16 %v374
      %v438 = vunpack.c.l.b16 %v375
      %v439 = vunpack.c.l.b16 %v376
      %v440 = vunpack.c.l.b16 %v377
      %v441 = vunpack.c.l.b16 %v378
      %v442 = vunpack.c.l.b16 %v379
      %v443 = vunpack.c.l.b16 %v380
      %v444 = vunpack.c.l.b16 %v381
      %v445 = vunpack.c.l.b16 %v382
      %v446 = vunpack.c.l.b16 %v383
      %v447 = vunpack.c.l.b16 %v384
      %v448 = vunpack.c.l.b16 %v385
      %v449 = vpack.c.b16 %v434, %v433
      %v450 = vpack.c.b16 %v436, %v435
      %v451 = vpack.c.b16 %v438, %v437
      %v452 = vpack.c.b16 %v440, %v439
      %v453 = vpack.c.b16 %v442, %v441
      %v454 = vpack.c.b16 %v444, %v443
      %v455 = vpack.c.b16 %v446, %v445
      %v456 = vpack.c.b16 %v448, %v447
      %465 = vmatprep.subr.bf16.mxu0 0
      %466 = vmatpush1.bf16.msra.mxu0 %v456
      %467 = vmatprep.subr.bf16.mxu0 0
      %468 = vmatpush1.bf16.msra.mxu0 %v455
      %469 = vmatprep.subr.bf16.mxu0 0
      %470 = vmatpush1.bf16.msra.mxu0 %v454
      %471 = vmatprep.subr.bf16.mxu0 0
      %472 = vmatpush1.bf16.msra.mxu0 %v453
      %473 = vmatprep.subr.bf16.mxu0 0
      %474 = vmatpush1.bf16.msra.mxu0 %v452
      %475 = vmatprep.subr.bf16.mxu0 0
      %476 = vmatpush1.bf16.msra.mxu0 %v451
      %477 = vmatprep.subr.bf16.mxu0 0
      %478 = vmatpush1.bf16.msra.mxu0 %v450
      %479 = vmatprep.subr.bf16.mxu0 0
      %480 = vmatpush1.bf16.msra.mxu0 %v449
      %481 = vmatprep.subr.bf16.mxu0 0
      %482 = vmatpush2.bf16.msra.mxu0 0
      %483 = vmatprep.subr.bf16.mxu0 0
      %484 = vmatpush2.bf16.msra.mxu0 0
      %485 = vmatprep.subr.bf16.mxu0 0
      %486 = vmatpush2.bf16.msra.mxu0 0
      %487 = vmatprep.subr.bf16.mxu0 0
      %488 = vmatpush2.bf16.msra.mxu0 0
      %489 = vmatprep.subr.bf16.mxu0 0
      %490 = vmatpush2.bf16.msra.mxu0 0
      %491 = vmatprep.subr.bf16.mxu0 0
      %492 = vmatpush2.bf16.msra.mxu0 0
      %493 = vmatprep.subr.bf16.mxu0 0
      %494 = vmatpush2.bf16.msra.mxu0 0
      %495 = vmatprep.subr.bf16.mxu0 0
      %496 = vmatpush2.bf16.msra.mxu0 0
      %497 = vmatprep.mubr.bf16.mxu0 0
      %498 = vmatmul.mubr.bf16.gmra.mxu0 %v409
      %v499 = vpop.f32.mrf.mxu0
      %v500 = vadd.f32 %v391, %v499
      %v501 = vpop.f32.mrf.mxu0
      %v502 = vpop.f32.mrf.mxu0
      %v503 = vadd.f32 %v391, %v502
      %v504 = vpop.f32.mrf.mxu0
      %505 = vmatprep.mubr.bf16.mxu0 0
      %506 = vmatmul.mubr.bf16.gmra.mxu0 %v410
      %v507 = vpop.f32.mrf.mxu0
      %v508 = vadd.f32 %v391, %v507
      %v509 = vpop.f32.mrf.mxu0
      %v510 = vpop.f32.mrf.mxu0
      %v511 = vadd.f32 %v391, %v510
      %v512 = vpop.f32.mrf.mxu0
      %513 = vmatprep.mubr.bf16.mxu0 0
      %514 = vmatmul.mubr.bf16.gmra.mxu0 %v411
      %v515 = vpop.f32.mrf.mxu0
      %v516 = vadd.f32 %v391, %v515
      %v517 = vpop.f32.mrf.mxu0
      %v518 = vpop.f32.mrf.mxu0
      %v519 = vadd.f32 %v391, %v518
      %v520 = vpop.f32.mrf.mxu0
      %521 = vmatprep.mubr.bf16.mxu0 0
      %522 = vmatmul.mubr.bf16.gmra.mxu0 %v412
      %v523 = vpop.f32.mrf.mxu0
      %v524 = vadd.f32 %v391, %v523
      %v525 = vpop.f32.mrf.mxu0
      %v526 = vpop.f32.mrf.mxu0
      %v527 = vadd.f32 %v391, %v526
      %v528 = vpop.f32.mrf.mxu0
      %529 = vdwg.mxu0
      %v530 = vmax.f32 %v500, 0.0
      %v531 = vmax.f32 %v503, 0.0
      %v532 = vmax.f32 %v508, 0.0
      %v533 = vmax.f32 %v511, 0.0
      %v534 = vmax.f32 %v516, 0.0
      %v535 = vmax.f32 %v519, 0.0
      %v536 = vmax.f32 %v524, 0.0
      %v537 = vmax.f32 %v527, 0.0
      %s538 = sadd.s32 0, 8
      %v539 = vpack.c.bf16 %v531, %v530
      %v540 = vpack.c.bf16 %v533, %v532
      %v541 = vpack.c.bf16 %v535, %v534
      %v542 = vpack.c.bf16 %v537, %v536
      %v547 = vunpack.c.l.b16 %v539
      %v548 = vunpack.c.h.b16 %v539
      %v549 = vunpack.c.l.b16 %v540
      %v550 = vunpack.c.h.b16 %v540
      %v551 = vunpack.c.l.b16 %v541
      %v552 = vunpack.c.h.b16 %v541
      %v553 = vunpack.c.l.b16 %v542
      %v554 = vunpack.c.h.b16 %v542
      %v555 = vpack.c.b16 %v547, %v547
      %v556 = vpack.c.b16 %v548, %v548
      %v557 = vpack.c.b16 %v549, %v549
      %v558 = vpack.c.b16 %v550, %v550
      %v559 = vpack.c.b16 %v551, %v551
      %v560 = vpack.c.b16 %v552, %v552
      %v561 = vpack.c.b16 %v553, %v553
      %v562 = vpack.c.b16 %v554, %v554
      %s571 = sshra.s32 %s538, 3
      %s572 = sand.u32 %s538, 7
      %s573 = smul.u32 %s571, 3
      %s574 = smul.addr %s573, 4
      %s575 = scalar_lea.vmem [#allocation2], %s574
      %576 = vst [vmem:[%s575 + $0x4] sm:$0xf] %v555
      %577 = vst [vmem:[%s575 + $0x10] sm:$0xf] %v556
      %578 = vst [vmem:[%s575 + $0x1c] sm:$0xf] %v557
      %579 = vst [vmem:[%s575 + $0x28] sm:$0xf] %v558
      %580 = vst [vmem:[%s575 + $0x34] sm:$0xf] %v559
      %581 = vst [vmem:[%s575 + $0x40] sm:$0xf] %v560
      %582 = vst [vmem:[%s575 + $0x4c] sm:$0xf] %v561
      %583 = vst [vmem:[%s575 + $0x58] sm:$0xf] %v562
      %vm584 = vcmp.eq.s32.totalorder %v354, 0
      %vm585 = vcmp.eq.s32.totalorder %v355, 0
      %vm586 = vcmp.eq.s32.totalorder %v356, 0
      %vm587 = vcmp.eq.s32.totalorder %v357, 0
      %vm588 = vcmp.eq.s32.totalorder %v358, 0
      %vm589 = vcmp.eq.s32.totalorder %v359, 0
      %vm590 = vcmp.eq.s32.totalorder %v360, 0
      %vm591 = vcmp.eq.s32.totalorder %v361, 0
      %v592 = vrot.slane %v530, 7
      %v593 = vrot.slane %v531, 7
      %v594 = vrot.slane %v532, 7
      %v595 = vrot.slane %v533, 7
      %v596 = vrot.slane %v534, 7
      %v597 = vrot.slane %v535, 7
      %v598 = vrot.slane %v536, 7
      %v599 = vrot.slane %v537, 7
      %vm600 = vcmp.lt.s32.totalorder %v258, 1
      %v601 = vsel %vm600, %v598, %v599
      %v602 = vsel %vm600, %v597, %v598
      %v603 = vsel %vm600, %v596, %v597
      %v604 = vsel %vm600, %v595, %v596
      %v605 = vsel %vm600, %v594, %v595
      %v606 = vsel %vm600, %v593, %v594
      %v607 = vsel %vm600, %v592, %v593
      %v608 = vsel %vm600, %v599, %v592
      %v609 = vsel %vm584, 1, 0
      %v610 = vsel %vm585, 1, 0
      %v611 = vsel %vm586, 1, 0
      %v612 = vsel %vm587, 1, 0
      %v613 = vsel %vm588, 1, 0
      %v614 = vsel %vm589, 1, 0
      %v615 = vsel %vm590, 1, 0
      %v616 = vsel %vm591, 1, 0
      %vm617 = vcmp.eq.s32.totalorder %v609, 1
      %vm618 = vcmp.eq.s32.totalorder %v610, 1
      %vm619 = vcmp.eq.s32.totalorder %v611, 1
      %vm620 = vcmp.eq.s32.totalorder %v612, 1
      %vm621 = vcmp.eq.s32.totalorder %v613, 1
      %vm622 = vcmp.eq.s32.totalorder %v614, 1
      %vm623 = vcmp.eq.s32.totalorder %v615, 1
      %vm624 = vcmp.eq.s32.totalorder %v616, 1
      %v625 = vsel %vm617, 0.0, %v608
      %v626 = vsel %vm618, 0.0, %v607
      %v627 = vsel %vm619, 0.0, %v606
      %v628 = vsel %vm620, 0.0, %v605
      %v629 = vsel %vm621, 0.0, %v604
      %v630 = vsel %vm622, 0.0, %v603
      %v631 = vsel %vm623, 0.0, %v602
      %v632 = vsel %vm624, 0.0, %v601
      %v633 = vpack.c.bf16 %v626, %v625
      %v634 = vpack.c.bf16 %v628, %v627
      %v635 = vpack.c.bf16 %v630, %v629
      %v636 = vpack.c.bf16 %v632, %v631
      %v641 = vunpack.c.l.b16 %v633
      %v642 = vunpack.c.h.b16 %v633
      %v643 = vunpack.c.l.b16 %v634
      %v644 = vunpack.c.h.b16 %v634
      %v645 = vunpack.c.l.b16 %v635
      %v646 = vunpack.c.h.b16 %v635
      %v647 = vunpack.c.l.b16 %v636
      %v648 = vunpack.c.h.b16 %v636
      %v649 = vpack.c.b16 %v641, %v641
      %v650 = vpack.c.b16 %v642, %v642
      %v651 = vpack.c.b16 %v643, %v643
      %v652 = vpack.c.b16 %v644, %v644
      %v653 = vpack.c.b16 %v645, %v645
      %v654 = vpack.c.b16 %v646, %v646
      %v655 = vpack.c.b16 %v647, %v647
      %v656 = vpack.c.b16 %v648, %v648
      %665 = vst [vmem:[%s575] sm:$0xf] %v649
      %666 = vst [vmem:[%s575 + $0xc] sm:$0xf] %v650
      %667 = vst [vmem:[%s575 + $0x18] sm:$0xf] %v651
      %668 = vst [vmem:[%s575 + $0x24] sm:$0xf] %v652
      %669 = vst [vmem:[%s575 + $0x30] sm:$0xf] %v653
      %670 = vst [vmem:[%s575 + $0x3c] sm:$0xf] %v654
      %671 = vst [vmem:[%s575 + $0x48] sm:$0xf] %v655
      %672 = vst [vmem:[%s575 + $0x54] sm:$0xf] %v656
      %vm673 = vcmp.eq.s32.totalorder %v354, 7
      %vm674 = vcmp.eq.s32.totalorder %v355, 7
      %vm675 = vcmp.eq.s32.totalorder %v356, 7
      %vm676 = vcmp.eq.s32.totalorder %v357, 7
      %vm677 = vcmp.eq.s32.totalorder %v358, 7
      %vm678 = vcmp.eq.s32.totalorder %v359, 7
      %vm679 = vcmp.eq.s32.totalorder %v360, 7
      %vm680 = vcmp.eq.s32.totalorder %v361, 7
      %v681 = vrot.slane %v530, 1
      %v682 = vrot.slane %v531, 1
      %v683 = vrot.slane %v532, 1
      %v684 = vrot.slane %v533, 1
      %v685 = vrot.slane %v534, 1
      %v686 = vrot.slane %v535, 1
      %v687 = vrot.slane %v536, 1
      %v688 = vrot.slane %v537, 1
      %vm689 = vcmp.lt.s32.totalorder %v258, 7
      %v690 = vsel %vm689, %v687, %v688
      %v691 = vsel %vm689, %v686, %v687
      %v692 = vsel %vm689, %v685, %v686
      %v693 = vsel %vm689, %v684, %v685
      %v694 = vsel %vm689, %v683, %v684
      %v695 = vsel %vm689, %v682, %v683
      %v696 = vsel %vm689, %v681, %v682
      %v697 = vsel %vm689, %v688, %v681
      %v698 = vsel %vm673, 1, 0
      %v699 = vsel %vm674, 1, 0
      %v700 = vsel %vm675, 1, 0
      %v701 = vsel %vm676, 1, 0
      %v702 = vsel %vm677, 1, 0
      %v703 = vsel %vm678, 1, 0
      %v704 = vsel %vm679, 1, 0
      %v705 = vsel %vm680, 1, 0
      %vm706 = vcmp.eq.s32.totalorder %v698, 1
      %vm707 = vcmp.eq.s32.totalorder %v699, 1
      %vm708 = vcmp.eq.s32.totalorder %v700, 1
      %vm709 = vcmp.eq.s32.totalorder %v701, 1
      %vm710 = vcmp.eq.s32.totalorder %v702, 1
      %vm711 = vcmp.eq.s32.totalorder %v703, 1
      %vm712 = vcmp.eq.s32.totalorder %v704, 1
      %vm713 = vcmp.eq.s32.totalorder %v705, 1
      %v714 = vsel %vm706, 0.0, %v696
      %v715 = vsel %vm707, 0.0, %v695
      %v716 = vsel %vm708, 0.0, %v694
      %v717 = vsel %vm709, 0.0, %v693
      %v718 = vsel %vm710, 0.0, %v692
      %v719 = vsel %vm711, 0.0, %v691
      %v720 = vsel %vm712, 0.0, %v690
      %v721 = vsel %vm713, 0.0, %v697
      %v722 = vpack.c.bf16 %v715, %v714
      %v723 = vpack.c.bf16 %v717, %v716
      %v724 = vpack.c.bf16 %v719, %v718
      %v725 = vpack.c.bf16 %v721, %v720
      %v730 = vunpack.c.l.b16 %v722
      %v731 = vunpack.c.h.b16 %v722
      %v732 = vunpack.c.l.b16 %v723
      %v733 = vunpack.c.h.b16 %v723
      %v734 = vunpack.c.l.b16 %v724
      %v735 = vunpack.c.h.b16 %v724
      %v736 = vunpack.c.l.b16 %v725
      %v737 = vunpack.c.h.b16 %v725
      %v738 = vpack.c.b16 %v730, %v730
      %v739 = vpack.c.b16 %v731, %v731
      %v740 = vpack.c.b16 %v732, %v732
      %v741 = vpack.c.b16 %v733, %v733
      %v742 = vpack.c.b16 %v734, %v734
      %v743 = vpack.c.b16 %v735, %v735
      %v744 = vpack.c.b16 %v736, %v736
      %v745 = vpack.c.b16 %v737, %v737
      %754 = vst [vmem:[%s575 + $0x8] sm:$0xf] %v738
      %755 = vst [vmem:[%s575 + $0x14] sm:$0xf] %v739
      %756 = vst [vmem:[%s575 + $0x20] sm:$0xf] %v740
      %757 = vst [vmem:[%s575 + $0x2c] sm:$0xf] %v741
      %758 = vst [vmem:[%s575 + $0x38] sm:$0xf] %v742
      %759 = vst [vmem:[%s575 + $0x44] sm:$0xf] %v743
      %760 = vst [vmem:[%s575 + $0x50] sm:$0xf] %v744
      %761 = vst [vmem:[%s575 + $0x5c] sm:$0xf] %v745
      %v762 = vld [vmem:[%s246] sm:$0xf]
      %v763 = vld [vmem:[%s246 + $0x4] sm:$0xf]
      %v764 = vld [vmem:[%s246 + $0x8] sm:$0xf]
      %v765 = vld [vmem:[%s246 + $0xc] sm:$0xf]
      %v766 = vld [vmem:[%s246 + $0x10] sm:$0xf]
      %v767 = vld [vmem:[%s246 + $0x14] sm:$0xf]
      %v768 = vld [vmem:[%s246 + $0x18] sm:$0xf]
      %v769 = vld [vmem:[%s246 + $0x1c] sm:$0xf]
      %v770 = vld [vmem:[%s4] sm:$0xf]
      %v771 = vld [vmem:[%s4 + $0x4] sm:$0xf]
      %v772 = vld [vmem:[%s4 + $0x8] sm:$0xf]
      %v773 = vld [vmem:[%s4 + $0xc] sm:$0xf]
      %v774 = vld [vmem:[%s4 + $0x10] sm:$0xf]
      %v775 = vld [vmem:[%s4 + $0x14] sm:$0xf]
      %v776 = vld [vmem:[%s4 + $0x18] sm:$0xf]
      %v777 = vld [vmem:[%s4 + $0x1c] sm:$0xf]
      %v778 = vld [vmem:[%s4 + $0x20] sm:$0xf]
      %v779 = vld [vmem:[%s4 + $0x24] sm:$0xf]
      %v780 = vld [vmem:[%s4 + $0x28] sm:$0xf]
      %v781 = vld [vmem:[%s4 + $0x2c] sm:$0xf]
      %v782 = vld [vmem:[%s4 + $0x30] sm:$0xf]
      %v783 = vld [vmem:[%s4 + $0x34] sm:$0xf]
      %v784 = vld [vmem:[%s4 + $0x38] sm:$0xf]
      %v785 = vld [vmem:[%s4 + $0x3c] sm:$0xf]
      %s786 = smul.u32 0, 3
      %s787 = smul.addr %s786, 4
      %s788 = scalar_lea.vmem [#allocation2], %s787
      %v789 = vld [vmem:[%s788] sm:$0xff]
      %v790 = vld [vmem:[%s788 + $0x8] sm:$0xf]
      %v791 = vld [vmem:[%s788 + $0xc] sm:$0xff]
      %v792 = vld [vmem:[%s788 + $0x14] sm:$0xf]
      %v793 = vld [vmem:[%s788 + $0x18] sm:$0xff]
      %v794 = vld [vmem:[%s788 + $0x20] sm:$0xf]
      %v795 = vld [vmem:[%s788 + $0x24] sm:$0xff]
      %v796 = vld [vmem:[%s788 + $0x2c] sm:$0xf]
      %v797 = vld [vmem:[%s788 + $0x30] sm:$0xff]
      %v798 = vld [vmem:[%s788 + $0x38] sm:$0xf]
      %v799 = vld [vmem:[%s788 + $0x3c] sm:$0xff]
      %v800 = vld [vmem:[%s788 + $0x44] sm:$0xf]
      %v801 = vld [vmem:[%s788 + $0x48] sm:$0xff]
      %v802 = vld [vmem:[%s788 + $0x50] sm:$0xf]
      %v803 = vld [vmem:[%s788 + $0x54] sm:$0xff]
      %v804 = vld [vmem:[%s788 + $0x5c] sm:$0xf]
      %v805 = vld [vmem:[%s3] sm:$0xf]
      %v806 = vld [vmem:[%s3 + $0x4] sm:$0xf]
      %v807 = vld [vmem:[%s3 + $0x8] sm:$0xf]
      %v808 = vld [vmem:[%s3 + $0xc] sm:$0xf]
      %v809 = vld [vmem:[%s3 + $0x10] sm:$0xf]
      %v810 = vld [vmem:[%s3 + $0x14] sm:$0xf]
      %v811 = vld [vmem:[%s3 + $0x18] sm:$0xf]
      %v812 = vld [vmem:[%s3 + $0x1c] sm:$0xf]
      %v813 = vld [vmem:[%s3 + $0x20] sm:$0xf]
      %v814 = vld [vmem:[%s3 + $0x24] sm:$0xf]
      %v815 = vld [vmem:[%s3 + $0x28] sm:$0xf]
      %v816 = vld [vmem:[%s3 + $0x2c] sm:$0xf]
      %v817 = vld [vmem:[%s3 + $0x30] sm:$0xf]
      %v818 = vld [vmem:[%s3 + $0x34] sm:$0xf]
      %v819 = vld [vmem:[%s3 + $0x38] sm:$0xf]
      %v820 = vld [vmem:[%s3 + $0x3c] sm:$0xf]
      %v821 = vld [vmem:[%s3 + $0x40] sm:$0xf]
      %v822 = vld [vmem:[%s3 + $0x44] sm:$0xf]
      %v823 = vld [vmem:[%s3 + $0x48] sm:$0xf]
      %v824 = vld [vmem:[%s3 + $0x4c] sm:$0xf]
      %v825 = vld [vmem:[%s3 + $0x50] sm:$0xf]
      %v826 = vld [vmem:[%s3 + $0x54] sm:$0xf]
      %v827 = vld [vmem:[%s3 + $0x58] sm:$0xf]
      %v828 = vld [vmem:[%s3 + $0x5c] sm:$0xf]
      %v829 = vld [vmem:[%s3 + $0x60] sm:$0xf]
      %v830 = vld [vmem:[%s3 + $0x64] sm:$0xf]
      %v831 = vld [vmem:[%s3 + $0x68] sm:$0xf]
      %v832 = vld [vmem:[%s3 + $0x6c] sm:$0xf]
      %v833 = vld [vmem:[%s3 + $0x70] sm:$0xf]
      %v834 = vld [vmem:[%s3 + $0x74] sm:$0xf]
      %v835 = vld [vmem:[%s3 + $0x78] sm:$0xf]
      %v836 = vld [vmem:[%s3 + $0x7c] sm:$0xf]
      %v837 = vld [vmem:[%s3 + $0x80] sm:$0xf]
      %v838 = vld [vmem:[%s3 + $0x84] sm:$0xf]
      %v839 = vld [vmem:[%s3 + $0x88] sm:$0xf]
      %v840 = vld [vmem:[%s3 + $0x8c] sm:$0xf]
      %v841 = vld [vmem:[%s3 + $0x90] sm:$0xf]
      %v842 = vld [vmem:[%s3 + $0x94] sm:$0xf]
      %v843 = vld [vmem:[%s3 + $0x98] sm:$0xf]
      %v844 = vld [vmem:[%s3 + $0x9c] sm:$0xf]
      %v845 = vld [vmem:[%s3 + $0xa0] sm:$0xf]
      %v846 = vld [vmem:[%s3 + $0xa4] sm:$0xf]
      %v847 = vld [vmem:[%s3 + $0xa8] sm:$0xf]
      %v848 = vld [vmem:[%s3 + $0xac] sm:$0xf]
      %v849 = vld [vmem:[%s3 + $0xb0] sm:$0xf]
      %v850 = vld [vmem:[%s3 + $0xb4] sm:$0xf]
      %v851 = vld [vmem:[%s3 + $0xb8] sm:$0xf]
      %v852 = vld [vmem:[%s3 + $0xbc] sm:$0xf]
      %v869 = vunpack.c.l.b16 %v789
      %v870 = vunpack.c.h.b16 %v789
      %v871 = vunpack.c.l.b16 %v790
      %v872 = vunpack.c.l.b16 %v791
      %v873 = vunpack.c.h.b16 %v791
      %v874 = vunpack.c.l.b16 %v792
      %v875 = vunpack.c.l.b16 %v793
      %v876 = vunpack.c.h.b16 %v793
      %v877 = vunpack.c.l.b16 %v794
      %v878 = vunpack.c.l.b16 %v795
      %v879 = vunpack.c.h.b16 %v795
      %v880 = vunpack.c.l.b16 %v796
      %v881 = vunpack.c.l.b16 %v797
      %v882 = vunpack.c.h.b16 %v797
      %v883 = vunpack.c.l.b16 %v798
      %v884 = vunpack.c.l.b16 %v799
      %v885 = vunpack.c.h.b16 %v799
      %v886 = vunpack.c.l.b16 %v800
      %v887 = vunpack.c.l.b16 %v801
      %v888 = vunpack.c.h.b16 %v801
      %v889 = vunpack.c.l.b16 %v802
      %v890 = vunpack.c.l.b16 %v803
      %v891 = vunpack.c.h.b16 %v803
      %v892 = vunpack.c.l.b16 %v804
      %v893 = vpack.c.b16 %v872, %v869
      %v894 = vpack.c.b16 %v873, %v870
      %v895 = vpack.c.b16 %v874, %v871
      %v896 = vpack.c.b16 %v878, %v875
      %v897 = vpack.c.b16 %v879, %v876
      %v898 = vpack.c.b16 %v880, %v877
      %v899 = vpack.c.b16 %v884, %v881
      %v900 = vpack.c.b16 %v885, %v882
      %v901 = vpack.c.b16 %v886, %v883
      %v902 = vpack.c.b16 %v890, %v887
      %v903 = vpack.c.b16 %v891, %v888
      %v904 = vpack.c.b16 %v892, %v889
      %v965 = vunpack.c.l.b16 %v805
      %v966 = vunpack.c.l.b16 %v806
      %v967 = vunpack.c.l.b16 %v807
      %v968 = vunpack.c.l.b16 %v808
      %v969 = vunpack.c.l.b16 %v809
      %v970 = vunpack.c.l.b16 %v810
      %v971 = vunpack.c.l.b16 %v811
      %v972 = vunpack.c.l.b16 %v812
      %v973 = vunpack.c.l.b16 %v813
      %v974 = vunpack.c.l.b16 %v814
      %v975 = vunpack.c.l.b16 %v815
      %v976 = vunpack.c.l.b16 %v816
      %v977 = vunpack.c.l.b16 %v817
      %v978 = vunpack.c.l.b16 %v818
      %v979 = vunpack.c.l.b16 %v819
      %v980 = vunpack.c.l.b16 %v820
      %v981 = vunpack.c.l.b16 %v821
      %v982 = vunpack.c.l.b16 %v822
      %v983 = vunpack.c.l.b16 %v823
      %v984 = vunpack.c.l.b16 %v824
      %v985 = vunpack.c.l.b16 %v825
      %v986 = vunpack.c.l.b16 %v826
      %v987 = vunpack.c.l.b16 %v827
      %v988 = vunpack.c.l.b16 %v828
      %v989 = vunpack.c.l.b16 %v829
      %v990 = vunpack.c.l.b16 %v830
      %v991 = vunpack.c.l.b16 %v831
      %v992 = vunpack.c.l.b16 %v832
      %v993 = vunpack.c.l.b16 %v833
      %v994 = vunpack.c.l.b16 %v834
      %v995 = vunpack.c.l.b16 %v835
      %v996 = vunpack.c.l.b16 %v836
      %v997 = vunpack.c.l.b16 %v837
      %v998 = vunpack.c.l.b16 %v838
      %v999 = vunpack.c.l.b16 %v839
      %v1000 = vunpack.c.l.b16 %v840
      %v1001 = vunpack.c.l.b16 %v841
      %v1002 = vunpack.c.l.b16 %v842
      %v1003 = vunpack.c.l.b16 %v843
      %v1004 = vunpack.c.l.b16 %v844
      %v1005 = vunpack.c.l.b16 %v845
      %v1006 = vunpack.c.l.b16 %v846
      %v1007 = vunpack.c.l.b16 %v847
      %v1008 = vunpack.c.l.b16 %v848
      %v1009 = vunpack.c.l.b16 %v849
      %v1010 = vunpack.c.l.b16 %v850
      %v1011 = vunpack.c.l.b16 %v851
      %v1012 = vunpack.c.l.b16 %v852
      %v1013 = vpack.c.b16 %v966, %v965
      %v1014 = vpack.c.b16 %v968, %v967
      %v1015 = vpack.c.b16 %v970, %v969
      %v1016 = vpack.c.b16 %v972, %v971
      %v1017 = vpack.c.b16 %v974, %v973
      %v1018 = vpack.c.b16 %v976, %v975
      %v1019 = vpack.c.b16 %v978, %v977
      %v1020 = vpack.c.b16 %v980, %v979
      %v1021 = vpack.c.b16 %v982, %v981
      %v1022 = vpack.c.b16 %v984, %v983
      %v1023 = vpack.c.b16 %v986, %v985
      %v1024 = vpack.c.b16 %v988, %v987
      %v1025 = vpack.c.b16 %v990, %v989
      %v1026 = vpack.c.b16 %v992, %v991
      %v1027 = vpack.c.b16 %v994, %v993
      %v1028 = vpack.c.b16 %v996, %v995
      %v1029 = vpack.c.b16 %v998, %v997
      %v1030 = vpack.c.b16 %v1000, %v999
      %v1031 = vpack.c.b16 %v1002, %v1001
      %v1032 = vpack.c.b16 %v1004, %v1003
      %v1033 = vpack.c.b16 %v1006, %v1005
      %v1034 = vpack.c.b16 %v1008, %v1007
      %v1035 = vpack.c.b16 %v1010, %v1009
      %v1036 = vpack.c.b16 %v1012, %v1011
      %1061 = vmatprep.subr.bf16.mxu0 0
      %1062 = vmatpush1.bf16.msra.mxu0 %v1020
      %1063 = vmatprep.subr.bf16.mxu0 0
      %1064 = vmatpush1.bf16.msra.mxu0 %v1019
      %1065 = vmatprep.subr.bf16.mxu0 0
      %1066 = vmatpush1.bf16.msra.mxu0 %v1018
      %1067 = vmatprep.subr.bf16.mxu0 0
      %1068 = vmatpush1.bf16.msra.mxu0 %v1017
      %1069 = vmatprep.subr.bf16.mxu0 0
      %1070 = vmatpush1.bf16.msra.mxu0 %v1016
      %1071 = vmatprep.subr.bf16.mxu0 0
      %1072 = vmatpush1.bf16.msra.mxu0 %v1015
      %1073 = vmatprep.subr.bf16.mxu0 0
      %1074 = vmatpush1.bf16.msra.mxu0 %v1014
      %1075 = vmatprep.subr.bf16.mxu0 0
      %1076 = vmatpush1.bf16.msra.mxu0 %v1013
      %1077 = vmatprep.subr.bf16.mxu0 0
      %1078 = vmatpush2.bf16.msra.mxu0 %v1028
      %1079 = vmatprep.subr.bf16.mxu0 0
      %1080 = vmatpush2.bf16.msra.mxu0 %v1027
      %1081 = vmatprep.subr.bf16.mxu0 0
      %1082 = vmatpush2.bf16.msra.mxu0 %v1026
      %1083 = vmatprep.subr.bf16.mxu0 0
      %1084 = vmatpush2.bf16.msra.mxu0 %v1025
      %1085 = vmatprep.subr.bf16.mxu0 0
      %1086 = vmatpush2.bf16.msra.mxu0 %v1024
      %1087 = vmatprep.subr.bf16.mxu0 0
      %1088 = vmatpush2.bf16.msra.mxu0 %v1023
      %1089 = vmatprep.subr.bf16.mxu0 0
      %1090 = vmatpush2.bf16.msra.mxu0 %v1022
      %1091 = vmatprep.subr.bf16.mxu0 0
      %1092 = vmatpush2.bf16.msra.mxu0 %v1021
      %1093 = vmatprep.mubr.bf16.mxu0 %v894
      %1094 = vmatmul.mubr.bf16.gmra.mxu0 %v893
      %v1095 = vpop.f32.mrf.mxu0
      %v1096 = vadd.f32 0.0, %v1095
      %v1097 = vpop.f32.mrf.mxu0
      %v1098 = vpop.f32.mrf.mxu0
      %v1099 = vadd.f32 0.0, %v1098
      %v1100 = vpop.f32.mrf.mxu0
      %1101 = vmatprep.mubr.bf16.mxu0 %v897
      %1102 = vmatmul.mubr.bf16.gmra.mxu0 %v896
      %v1103 = vpop.f32.mrf.mxu0
      %v1104 = vadd.f32 0.0, %v1103
      %v1105 = vpop.f32.mrf.mxu0
      %v1106 = vpop.f32.mrf.mxu0
      %v1107 = vadd.f32 0.0, %v1106
      %v1108 = vpop.f32.mrf.mxu0
      %1109 = vmatprep.mubr.bf16.mxu0 %v900
      %1110 = vmatmul.mubr.bf16.gmra.mxu0 %v899
      %v1111 = vpop.f32.mrf.mxu0
      %v1112 = vadd.f32 0.0, %v1111
      %v1113 = vpop.f32.mrf.mxu0
      %v1114 = vpop.f32.mrf.mxu0
      %v1115 = vadd.f32 0.0, %v1114
      %v1116 = vpop.f32.mrf.mxu0
      %1117 = vmatprep.mubr.bf16.mxu0 %v903
      %1118 = vmatmul.mubr.bf16.gmra.mxu0 %v902
      %v1119 = vpop.f32.mrf.mxu0
      %v1120 = vadd.f32 0.0, %v1119
      %v1121 = vpop.f32.mrf.mxu0
      %v1122 = vpop.f32.mrf.mxu0
      %v1123 = vadd.f32 0.0, %v1122
      %v1124 = vpop.f32.mrf.mxu0
      %1125 = vdwg.mxu0
      %1126 = vmatprep.subr.bf16.mxu0 0
      %1127 = vmatpush1.bf16.msra.mxu0 %v1036
      %1128 = vmatprep.subr.bf16.mxu0 0
      %1129 = vmatpush1.bf16.msra.mxu0 %v1035
      %1130 = vmatprep.subr.bf16.mxu0 0
      %1131 = vmatpush1.bf16.msra.mxu0 %v1034
      %1132 = vmatprep.subr.bf16.mxu0 0
      %1133 = vmatpush1.bf16.msra.mxu0 %v1033
      %1134 = vmatprep.subr.bf16.mxu0 0
      %1135 = vmatpush1.bf16.msra.mxu0 %v1032
      %1136 = vmatprep.subr.bf16.mxu0 0
      %1137 = vmatpush1.bf16.msra.mxu0 %v1031
      %1138 = vmatprep.subr.bf16.mxu0 0
      %1139 = vmatpush1.bf16.msra.mxu0 %v1030
      %1140 = vmatprep.subr.bf16.mxu0 0
      %1141 = vmatpush1.bf16.msra.mxu0 %v1029
      %1142 = vmatprep.subr.bf16.mxu0 0
      %1143 = vmatpush2.bf16.msra.mxu0 0
      %1144 = vmatprep.subr.bf16.mxu0 0
      %1145 = vmatpush2.bf16.msra.mxu0 0
      %1146 = vmatprep.subr.bf16.mxu0 0
      %1147 = vmatpush2.bf16.msra.mxu0 0
      %1148 = vmatprep.subr.bf16.mxu0 0
      %1149 = vmatpush2.bf16.msra.mxu0 0
      %1150 = vmatprep.subr.bf16.mxu0 0
      %1151 = vmatpush2.bf16.msra.mxu0 0
      %1152 = vmatprep.subr.bf16.mxu0 0
      %1153 = vmatpush2.bf16.msra.mxu0 0
      %1154 = vmatprep.subr.bf16.mxu0 0
      %1155 = vmatpush2.bf16.msra.mxu0 0
      %1156 = vmatprep.subr.bf16.mxu0 0
      %1157 = vmatpush2.bf16.msra.mxu0 0
      %1158 = vmatprep.mubr.bf16.mxu0 0
      %1159 = vmatmul.mubr.bf16.gmra.mxu0 %v895
      %v1160 = vpop.f32.mrf.mxu0
      %v1161 = vadd.f32 %v1096, %v1160
      %v1162 = vpop.f32.mrf.mxu0
      %v1163 = vpop.f32.mrf.mxu0
      %v1164 = vadd.f32 %v1099, %v1163
      %v1165 = vpop.f32.mrf.mxu0
      %1166 = vmatprep.mubr.bf16.mxu0 0
      %1167 = vmatmul.mubr.bf16.gmra.mxu0 %v898
      %v1168 = vpop.f32.mrf.mxu0
      %v1169 = vadd.f32 %v1104, %v1168
      %v1170 = vpop.f32.mrf.mxu0
      %v1171 = vpop.f32.mrf.mxu0
      %v1172 = vadd.f32 %v1107, %v1171
      %v1173 = vpop.f32.mrf.mxu0
      %1174 = vmatprep.mubr.bf16.mxu0 0
      %1175 = vmatmul.mubr.bf16.gmra.mxu0 %v901
      %v1176 = vpop.f32.mrf.mxu0
      %v1177 = vadd.f32 %v1112, %v1176
      %v1178 = vpop.f32.mrf.mxu0
      %v1179 = vpop.f32.mrf.mxu0
      %v1180 = vadd.f32 %v1115, %v1179
      %v1181 = vpop.f32.mrf.mxu0
      %1182 = vmatprep.mubr.bf16.mxu0 0
      %1183 = vmatmul.mubr.bf16.gmra.mxu0 %v904
      %v1184 = vpop.f32.mrf.mxu0
      %v1185 = vadd.f32 %v1120, %v1184
      %v1186 = vpop.f32.mrf.mxu0
      %v1187 = vpop.f32.mrf.mxu0
      %v1188 = vadd.f32 %v1123, %v1187
      %v1189 = vpop.f32.mrf.mxu0
      %1190 = vdwg.mxu0
      %v1199 = vunpack.c.l.b16 %v762
      %v1200 = vunpack.c.l.b16 %v763
      %v1201 = vunpack.c.l.b16 %v764
      %v1202 = vunpack.c.l.b16 %v765
      %v1203 = vunpack.c.l.b16 %v766
      %v1204 = vunpack.c.l.b16 %v767
      %v1205 = vunpack.c.l.b16 %v768
      %v1206 = vunpack.c.l.b16 %v769
      %v1207 = vpack.c.b16 %v1200, %v1199
      %v1208 = vpack.c.b16 %v1202, %v1201
      %v1209 = vpack.c.b16 %v1204, %v1203
      %v1210 = vpack.c.b16 %v1206, %v1205
      %v1231 = vunpack.c.l.b16 %v770
      %v1232 = vunpack.c.l.b16 %v771
      %v1233 = vunpack.c.l.b16 %v772
      %v1234 = vunpack.c.l.b16 %v773
      %v1235 = vunpack.c.l.b16 %v774
      %v1236 = vunpack.c.l.b16 %v775
      %v1237 = vunpack.c.l.b16 %v776
      %v1238 = vunpack.c.l.b16 %v777
      %v1239 = vunpack.c.l.b16 %v778
      %v1240 = vunpack.c.l.b16 %v779
      %v1241 = vunpack.c.l.b16 %v780
      %v1242 = vunpack.c.l.b16 %v781
      %v1243 = vunpack.c.l.b16 %v782
      %v1244 = vunpack.c.l.b16 %v783
      %v1245 = vunpack.c.l.b16 %v784
      %v1246 = vunpack.c.l.b16 %v785
      %v1247 = vpack.c.b16 %v1232, %v1231
      %v1248 = vpack.c.b16 %v1234, %v1233
      %v1249 = vpack.c.b16 %v1236, %v1235
      %v1250 = vpack.c.b16 %v1238, %v1237
      %v1251 = vpack.c.b16 %v1240, %v1239
      %v1252 = vpack.c.b16 %v1242, %v1241
      %v1253 = vpack.c.b16 %v1244, %v1243
      %v1254 = vpack.c.b16 %v1246, %v1245
      %1263 = vmatprep.subr.bf16.mxu0 0
      %1264 = vmatpush1.bf16.msra.mxu0 %v1254
      %1265 = vmatprep.subr.bf16.mxu0 0
      %1266 = vmatpush1.bf16.msra.mxu0 %v1253
      %1267 = vmatprep.subr.bf16.mxu0 0
      %1268 = vmatpush1.bf16.msra.mxu0 %v1252
      %1269 = vmatprep.subr.bf16.mxu0 0
      %1270 = vmatpush1.bf16.msra.mxu0 %v1251
      %1271 = vmatprep.subr.bf16.mxu0 0
      %1272 = vmatpush1.bf16.msra.mxu0 %v1250
      %1273 = vmatprep.subr.bf16.mxu0 0
      %1274 = vmatpush1.bf16.msra.mxu0 %v1249
      %1275 = vmatprep.subr.bf16.mxu0 0
      %1276 = vmatpush1.bf16.msra.mxu0 %v1248
      %1277 = vmatprep.subr.bf16.mxu0 0
      %1278 = vmatpush1.bf16.msra.mxu0 %v1247
      %1279 = vmatprep.subr.bf16.mxu0 0
      %1280 = vmatpush2.bf16.msra.mxu0 0
      %1281 = vmatprep.subr.bf16.mxu0 0
      %1282 = vmatpush2.bf16.msra.mxu0 0
      %1283 = vmatprep.subr.bf16.mxu0 0
      %1284 = vmatpush2.bf16.msra.mxu0 0
      %1285 = vmatprep.subr.bf16.mxu0 0
      %1286 = vmatpush2.bf16.msra.mxu0 0
      %1287 = vmatprep.subr.bf16.mxu0 0
      %1288 = vmatpush2.bf16.msra.mxu0 0
      %1289 = vmatprep.subr.bf16.mxu0 0
      %1290 = vmatpush2.bf16.msra.mxu0 0
      %1291 = vmatprep.subr.bf16.mxu0 0
      %1292 = vmatpush2.bf16.msra.mxu0 0
      %1293 = vmatprep.subr.bf16.mxu0 0
      %1294 = vmatpush2.bf16.msra.mxu0 0
      %1295 = vmatprep.mubr.bf16.mxu0 0
      %1296 = vmatmul.mubr.bf16.gmra.mxu0 %v1207
      %v1297 = vpop.f32.mrf.mxu0
      %v1298 = vadd.f32 %v1161, %v1297
      %v1299 = vpop.f32.mrf.mxu0
      %v1300 = vpop.f32.mrf.mxu0
      %v1301 = vadd.f32 %v1164, %v1300
      %v1302 = vpop.f32.mrf.mxu0
      %1303 = vmatprep.mubr.bf16.mxu0 0
      %1304 = vmatmul.mubr.bf16.gmra.mxu0 %v1208
      %v1305 = vpop.f32.mrf.mxu0
      %v1306 = vadd.f32 %v1169, %v1305
      %v1307 = vpop.f32.mrf.mxu0
      %v1308 = vpop.f32.mrf.mxu0
      %v1309 = vadd.f32 %v1172, %v1308
      %v1310 = vpop.f32.mrf.mxu0
      %1311 = vmatprep.mubr.bf16.mxu0 0
      %1312 = vmatmul.mubr.bf16.gmra.mxu0 %v1209
      %v1313 = vpop.f32.mrf.mxu0
      %v1314 = vadd.f32 %v1177, %v1313
      %v1315 = vpop.f32.mrf.mxu0
      %v1316 = vpop.f32.mrf.mxu0
      %v1317 = vadd.f32 %v1180, %v1316
      %v1318 = vpop.f32.mrf.mxu0
      %1319 = vmatprep.mubr.bf16.mxu0 0
      %1320 = vmatmul.mubr.bf16.gmra.mxu0 %v1210
      %v1321 = vpop.f32.mrf.mxu0
      %v1322 = vadd.f32 %v1185, %v1321
      %v1323 = vpop.f32.mrf.mxu0
      %v1324 = vpop.f32.mrf.mxu0
      %v1325 = vadd.f32 %v1188, %v1324
      %v1326 = vpop.f32.mrf.mxu0
      %1327 = vdwg.mxu0
      %v1328 = vld [vmem:[%s575] sm:$0xff]
      %v1329 = vld [vmem:[%s575 + $0x8] sm:$0xf]
      %v1330 = vld [vmem:[%s575 + $0xc] sm:$0xff]
      %v1331 = vld [vmem:[%s575 + $0x14] sm:$0xf]
      %v1332 = vld [vmem:[%s575 + $0x18] sm:$0xff]
      %v1333 = vld [vmem:[%s575 + $0x20] sm:$0xf]
      %v1334 = vld [vmem:[%s575 + $0x24] sm:$0xff]
      %v1335 = vld [vmem:[%s575 + $0x2c] sm:$0xf]
      %v1336 = vld [vmem:[%s575 + $0x30] sm:$0xff]
      %v1337 = vld [vmem:[%s575 + $0x38] sm:$0xf]
      %v1338 = vld [vmem:[%s575 + $0x3c] sm:$0xff]
      %v1339 = vld [vmem:[%s575 + $0x44] sm:$0xf]
      %v1340 = vld [vmem:[%s575 + $0x48] sm:$0xff]
      %v1341 = vld [vmem:[%s575 + $0x50] sm:$0xf]
      %v1342 = vld [vmem:[%s575 + $0x54] sm:$0xff]
      %v1343 = vld [vmem:[%s575 + $0x5c] sm:$0xf]
      %s1344 = scalar_lea.vmem %s3, 192
      %v1345 = vld [vmem:[%s1344] sm:$0xf]
      %v1346 = vld [vmem:[%s1344 + $0x4] sm:$0xf]
      %v1347 = vld [vmem:[%s1344 + $0x8] sm:$0xf]
      %v1348 = vld [vmem:[%s1344 + $0xc] sm:$0xf]
      %v1349 = vld [vmem:[%s1344 + $0x10] sm:$0xf]
      %v1350 = vld [vmem:[%s1344 + $0x14] sm:$0xf]
      %v1351 = vld [vmem:[%s1344 + $0x18] sm:$0xf]
      %v1352 = vld [vmem:[%s1344 + $0x1c] sm:$0xf]
      %v1353 = vld [vmem:[%s1344 + $0x20] sm:$0xf]
      %v1354 = vld [vmem:[%s1344 + $0x24] sm:$0xf]
      %v1355 = vld [vmem:[%s1344 + $0x28] sm:$0xf]
      %v1356 = vld [vmem:[%s1344 + $0x2c] sm:$0xf]
      %v1357 = vld [vmem:[%s1344 + $0x30] sm:$0xf]
      %v1358 = vld [vmem:[%s1344 + $0x34] sm:$0xf]
      %v1359 = vld [vmem:[%s1344 + $0x38] sm:$0xf]
      %v1360 = vld [vmem:[%s1344 + $0x3c] sm:$0xf]
      %v1361 = vld [vmem:[%s1344 + $0x40] sm:$0xf]
      %v1362 = vld [vmem:[%s1344 + $0x44] sm:$0xf]
      %v1363 = vld [vmem:[%s1344 + $0x48] sm:$0xf]
      %v1364 = vld [vmem:[%s1344 + $0x4c] sm:$0xf]
      %v1365 = vld [vmem:[%s1344 + $0x50] sm:$0xf]
      %v1366 = vld [vmem:[%s1344 + $0x54] sm:$0xf]
      %v1367 = vld [vmem:[%s1344 + $0x58] sm:$0xf]
      %v1368 = vld [vmem:[%s1344 + $0x5c] sm:$0xf]
      %v1369 = vld [vmem:[%s1344 + $0x60] sm:$0xf]
      %v1370 = vld [vmem:[%s1344 + $0x64] sm:$0xf]
      %v1371 = vld [vmem:[%s1344 + $0x68] sm:$0xf]
      %v1372 = vld [vmem:[%s1344 + $0x6c] sm:$0xf]
      %v1373 = vld [vmem:[%s1344 + $0x70] sm:$0xf]
      %v1374 = vld [vmem:[%s1344 + $0x74] sm:$0xf]
      %v1375 = vld [vmem:[%s1344 + $0x78] sm:$0xf]
      %v1376 = vld [vmem:[%s1344 + $0x7c] sm:$0xf]
      %v1377 = vld [vmem:[%s1344 + $0x80] sm:$0xf]
      %v1378 = vld [vmem:[%s1344 + $0x84] sm:$0xf]
      %v1379 = vld [vmem:[%s1344 + $0x88] sm:$0xf]
      %v1380 = vld [vmem:[%s1344 + $0x8c] sm:$0xf]
      %v1381 = vld [vmem:[%s1344 + $0x90] sm:$0xf]
      %v1382 = vld [vmem:[%s1344 + $0x94] sm:$0xf]
      %v1383 = vld [vmem:[%s1344 + $0x98] sm:$0xf]
      %v1384 = vld [vmem:[%s1344 + $0x9c] sm:$0xf]
      %v1385 = vld [vmem:[%s1344 + $0xa0] sm:$0xf]
      %v1386 = vld [vmem:[%s1344 + $0xa4] sm:$0xf]
      %v1387 = vld [vmem:[%s1344 + $0xa8] sm:$0xf]
      %v1388 = vld [vmem:[%s1344 + $0xac] sm:$0xf]
      %v1389 = vld [vmem:[%s1344 + $0xb0] sm:$0xf]
      %v1390 = vld [vmem:[%s1344 + $0xb4] sm:$0xf]
      %v1391 = vld [vmem:[%s1344 + $0xb8] sm:$0xf]
      %v1392 = vld [vmem:[%s1344 + $0xbc] sm:$0xf]
      %v1409 = vunpack.c.l.b16 %v1328
      %v1410 = vunpack.c.h.b16 %v1328
      %v1411 = vunpack.c.l.b16 %v1329
      %v1412 = vunpack.c.l.b16 %v1330
      %v1413 = vunpack.c.h.b16 %v1330
      %v1414 = vunpack.c.l.b16 %v1331
      %v1415 = vunpack.c.l.b16 %v1332
      %v1416 = vunpack.c.h.b16 %v1332
      %v1417 = vunpack.c.l.b16 %v1333
      %v1418 = vunpack.c.l.b16 %v1334
      %v1419 = vunpack.c.h.b16 %v1334
      %v1420 = vunpack.c.l.b16 %v1335
      %v1421 = vunpack.c.l.b16 %v1336
      %v1422 = vunpack.c.h.b16 %v1336
      %v1423 = vunpack.c.l.b16 %v1337
      %v1424 = vunpack.c.l.b16 %v1338
      %v1425 = vunpack.c.h.b16 %v1338
      %v1426 = vunpack.c.l.b16 %v1339
      %v1427 = vunpack.c.l.b16 %v1340
      %v1428 = vunpack.c.h.b16 %v1340
      %v1429 = vunpack.c.l.b16 %v1341
      %v1430 = vunpack.c.l.b16 %v1342
      %v1431 = vunpack.c.h.b16 %v1342
      %v1432 = vunpack.c.l.b16 %v1343
      %v1433 = vpack.c.b16 %v1412, %v1409
      %v1434 = vpack.c.b16 %v1413, %v1410
      %v1435 = vpack.c.b16 %v1414, %v1411
      %v1436 = vpack.c.b16 %v1418, %v1415
      %v1437 = vpack.c.b16 %v1419, %v1416
      %v1438 = vpack.c.b16 %v1420, %v1417
      %v1439 = vpack.c.b16 %v1424, %v1421
      %v1440 = vpack.c.b16 %v1425, %v1422
      %v1441 = vpack.c.b16 %v1426, %v1423
      %v1442 = vpack.c.b16 %v1430, %v1427
      %v1443 = vpack.c.b16 %v1431, %v1428
      %v1444 = vpack.c.b16 %v1432, %v1429
      %v1505 = vunpack.c.l.b16 %v1345
      %v1506 = vunpack.c.l.b16 %v1346
      %v1507 = vunpack.c.l.b16 %v1347
      %v1508 = vunpack.c.l.b16 %v1348
      %v1509 = vunpack.c.l.b16 %v1349
      %v1510 = vunpack.c.l.b16 %v1350
      %v1511 = vunpack.c.l.b16 %v1351
      %v1512 = vunpack.c.l.b16 %v1352
      %v1513 = vunpack.c.l.b16 %v1353
      %v1514 = vunpack.c.l.b16 %v1354
      %v1515 = vunpack.c.l.b16 %v1355
      %v1516 = vunpack.c.l.b16 %v1356
      %v1517 = vunpack.c.l.b16 %v1357
      %v1518 = vunpack.c.l.b16 %v1358
      %v1519 = vunpack.c.l.b16 %v1359
      %v1520 = vunpack.c.l.b16 %v1360
      %v1521 = vunpack.c.l.b16 %v1361
      %v1522 = vunpack.c.l.b16 %v1362
      %v1523 = vunpack.c.l.b16 %v1363
      %v1524 = vunpack.c.l.b16 %v1364
      %v1525 = vunpack.c.l.b16 %v1365
      %v1526 = vunpack.c.l.b16 %v1366
      %v1527 = vunpack.c.l.b16 %v1367
      %v1528 = vunpack.c.l.b16 %v1368
      %v1529 = vunpack.c.l.b16 %v1369
      %v1530 = vunpack.c.l.b16 %v1370
      %v1531 = vunpack.c.l.b16 %v1371
      %v1532 = vunpack.c.l.b16 %v1372
      %v1533 = vunpack.c.l.b16 %v1373
      %v1534 = vunpack.c.l.b16 %v1374
      %v1535 = vunpack.c.l.b16 %v1375
      %v1536 = vunpack.c.l.b16 %v1376
      %v1537 = vunpack.c.l.b16 %v1377
      %v1538 = vunpack.c.l.b16 %v1378
      %v1539 = vunpack.c.l.b16 %v1379
      %v1540 = vunpack.c.l.b16 %v1380
      %v1541 = vunpack.c.l.b16 %v1381
      %v1542 = vunpack.c.l.b16 %v1382
      %v1543 = vunpack.c.l.b16 %v1383
      %v1544 = vunpack.c.l.b16 %v1384
      %v1545 = vunpack.c.l.b16 %v1385
      %v1546 = vunpack.c.l.b16 %v1386
      %v1547 = vunpack.c.l.b16 %v1387
      %v1548 = vunpack.c.l.b16 %v1388
      %v1549 = vunpack.c.l.b16 %v1389
      %v1550 = vunpack.c.l.b16 %v1390
      %v1551 = vunpack.c.l.b16 %v1391
      %v1552 = vunpack.c.l.b16 %v1392
      %v1553 = vpack.c.b16 %v1506, %v1505
      %v1554 = vpack.c.b16 %v1508, %v1507
      %v1555 = vpack.c.b16 %v1510, %v1509
      %v1556 = vpack.c.b16 %v1512, %v1511
      %v1557 = vpack.c.b16 %v1514, %v1513
      %v1558 = vpack.c.b16 %v1516, %v1515
      %v1559 = vpack.c.b16 %v1518, %v1517
      %v1560 = vpack.c.b16 %v1520, %v1519
      %v1561 = vpack.c.b16 %v1522, %v1521
      %v1562 = vpack.c.b16 %v1524, %v1523
      %v1563 = vpack.c.b16 %v1526, %v1525
      %v1564 = vpack.c.b16 %v1528, %v1527
      %v1565 = vpack.c.b16 %v1530, %v1529
      %v1566 = vpack.c.b16 %v1532, %v1531
      %v1567 = vpack.c.b16 %v1534, %v1533
      %v1568 = vpack.c.b16 %v1536, %v1535
      %v1569 = vpack.c.b16 %v1538, %v1537
      %v1570 = vpack.c.b16 %v1540, %v1539
      %v1571 = vpack.c.b16 %v1542, %v1541
      %v1572 = vpack.c.b16 %v1544, %v1543
      %v1573 = vpack.c.b16 %v1546, %v1545
      %v1574 = vpack.c.b16 %v1548, %v1547
      %v1575 = vpack.c.b16 %v1550, %v1549
      %v1576 = vpack.c.b16 %v1552, %v1551
      %1601 = vmatprep.subr.bf16.mxu0 0
      %1602 = vmatpush1.bf16.msra.mxu0 %v1560
      %1603 = vmatprep.subr.bf16.mxu0 0
      %1604 = vmatpush1.bf16.msra.mxu0 %v1559
      %1605 = vmatprep.subr.bf16.mxu0 0
      %1606 = vmatpush1.bf16.msra.mxu0 %v1558
      %1607 = vmatprep.subr.bf16.mxu0 0
      %1608 = vmatpush1.bf16.msra.mxu0 %v1557
      %1609 = vmatprep.subr.bf16.mxu0 0
      %1610 = vmatpush1.bf16.msra.mxu0 %v1556
      %1611 = vmatprep.subr.bf16.mxu0 0
      %1612 = vmatpush1.bf16.msra.mxu0 %v1555
      %1613 = vmatprep.subr.bf16.mxu0 0
      %1614 = vmatpush1.bf16.msra.mxu0 %v1554
      %1615 = vmatprep.subr.bf16.mxu0 0
      %1616 = vmatpush1.bf16.msra.mxu0 %v1553
      %1617 = vmatprep.subr.bf16.mxu0 0
      %1618 = vmatpush2.bf16.msra.mxu0 %v1568
      %1619 = vmatprep.subr.bf16.mxu0 0
      %1620 = vmatpush2.bf16.msra.mxu0 %v1567
      %1621 = vmatprep.subr.bf16.mxu0 0
      %1622 = vmatpush2.bf16.msra.mxu0 %v1566
      %1623 = vmatprep.subr.bf16.mxu0 0
      %1624 = vmatpush2.bf16.msra.mxu0 %v1565
      %1625 = vmatprep.subr.bf16.mxu0 0
      %1626 = vmatpush2.bf16.msra.mxu0 %v1564
      %1627 = vmatprep.subr.bf16.mxu0 0
      %1628 = vmatpush2.bf16.msra.mxu0 %v1563
      %1629 = vmatprep.subr.bf16.mxu0 0
      %1630 = vmatpush2.bf16.msra.mxu0 %v1562
      %1631 = vmatprep.subr.bf16.mxu0 0
      %1632 = vmatpush2.bf16.msra.mxu0 %v1561
      %1633 = vmatprep.mubr.bf16.mxu0 %v1434
      %1634 = vmatmul.mubr.bf16.gmra.mxu0 %v1433
      %v1635 = vpop.f32.mrf.mxu0
      %v1636 = vadd.f32 0.0, %v1635
      %v1637 = vpop.f32.mrf.mxu0
      %v1638 = vpop.f32.mrf.mxu0
      %v1639 = vadd.f32 0.0, %v1638
      %v1640 = vpop.f32.mrf.mxu0
      %1641 = vmatprep.mubr.bf16.mxu0 %v1437
      %1642 = vmatmul.mubr.bf16.gmra.mxu0 %v1436
      %v1643 = vpop.f32.mrf.mxu0
      %v1644 = vadd.f32 0.0, %v1643
      %v1645 = vpop.f32.mrf.mxu0
      %v1646 = vpop.f32.mrf.mxu0
      %v1647 = vadd.f32 0.0, %v1646
      %v1648 = vpop.f32.mrf.mxu0
      %1649 = vmatprep.mubr.bf16.mxu0 %v1440
      %1650 = vmatmul.mubr.bf16.gmra.mxu0 %v1439
      %v1651 = vpop.f32.mrf.mxu0
      %v1652 = vadd.f32 0.0, %v1651
      %v1653 = vpop.f32.mrf.mxu0
      %v1654 = vpop.f32.mrf.mxu0
      %v1655 = vadd.f32 0.0, %v1654
      %v1656 = vpop.f32.mrf.mxu0
      %1657 = vmatprep.mubr.bf16.mxu0 %v1443
      %1658 = vmatmul.mubr.bf16.gmra.mxu0 %v1442
      %v1659 = vpop.f32.mrf.mxu0
      %v1660 = vadd.f32 0.0, %v1659
      %v1661 = vpop.f32.mrf.mxu0
      %v1662 = vpop.f32.mrf.mxu0
      %v1663 = vadd.f32 0.0, %v1662
      %v1664 = vpop.f32.mrf.mxu0
      %1665 = vdwg.mxu0
      %1666 = vmatprep.subr.bf16.mxu0 0
      %1667 = vmatpush1.bf16.msra.mxu0 %v1576
      %1668 = vmatprep.subr.bf16.mxu0 0
      %1669 = vmatpush1.bf16.msra.mxu0 %v1575
      %1670 = vmatprep.subr.bf16.mxu0 0
      %1671 = vmatpush1.bf16.msra.mxu0 %v1574
      %1672 = vmatprep.subr.bf16.mxu0 0
      %1673 = vmatpush1.bf16.msra.mxu0 %v1573
      %1674 = vmatprep.subr.bf16.mxu0 0
      %1675 = vmatpush1.bf16.msra.mxu0 %v1572
      %1676 = vmatprep.subr.bf16.mxu0 0
      %1677 = vmatpush1.bf16.msra.mxu0 %v1571
      %1678 = vmatprep.subr.bf16.mxu0 0
      %1679 = vmatpush1.bf16.msra.mxu0 %v1570
      %1680 = vmatprep.subr.bf16.mxu0 0
      %1681 = vmatpush1.bf16.msra.mxu0 %v1569
      %1682 = vmatprep.subr.bf16.mxu0 0
      %1683 = vmatpush2.bf16.msra.mxu0 0
      %1684 = vmatprep.subr.bf16.mxu0 0
      %1685 = vmatpush2.bf16.msra.mxu0 0
      %1686 = vmatprep.subr.bf16.mxu0 0
      %1687 = vmatpush2.bf16.msra.mxu0 0
      %1688 = vmatprep.subr.bf16.mxu0 0
      %1689 = vmatpush2.bf16.msra.mxu0 0
      %1690 = vmatprep.subr.bf16.mxu0 0
      %1691 = vmatpush2.bf16.msra.mxu0 0
      %1692 = vmatprep.subr.bf16.mxu0 0
      %1693 = vmatpush2.bf16.msra.mxu0 0
      %1694 = vmatprep.subr.bf16.mxu0 0
      %1695 = vmatpush2.bf16.msra.mxu0 0
      %1696 = vmatprep.subr.bf16.mxu0 0
      %1697 = vmatpush2.bf16.msra.mxu0 0
      %1698 = vmatprep.mubr.bf16.mxu0 0
      %1699 = vmatmul.mubr.bf16.gmra.mxu0 %v1435
      %v1700 = vpop.f32.mrf.mxu0
      %v1701 = vadd.f32 %v1636, %v1700
      %v1702 = vpop.f32.mrf.mxu0
      %v1703 = vpop.f32.mrf.mxu0
      %v1704 = vadd.f32 %v1639, %v1703
      %v1705 = vpop.f32.mrf.mxu0
      %1706 = vmatprep.mubr.bf16.mxu0 0
      %1707 = vmatmul.mubr.bf16.gmra.mxu0 %v1438
      %v1708 = vpop.f32.mrf.mxu0
      %v1709 = vadd.f32 %v1644, %v1708
      %v1710 = vpop.f32.mrf.mxu0
      %v1711 = vpop.f32.mrf.mxu0
      %v1712 = vadd.f32 %v1647, %v1711
      %v1713 = vpop.f32.mrf.mxu0
      %1714 = vmatprep.mubr.bf16.mxu0 0
      %1715 = vmatmul.mubr.bf16.gmra.mxu0 %v1441
      %v1716 = vpop.f32.mrf.mxu0
      %v1717 = vadd.f32 %v1652, %v1716
      %v1718 = vpop.f32.mrf.mxu0
      %v1719 = vpop.f32.mrf.mxu0
      %v1720 = vadd.f32 %v1655, %v1719
      %v1721 = vpop.f32.mrf.mxu0
      %1722 = vmatprep.mubr.bf16.mxu0 0
      %1723 = vmatmul.mubr.bf16.gmra.mxu0 %v1444
      %v1724 = vpop.f32.mrf.mxu0
      %v1725 = vadd.f32 %v1660, %v1724
      %v1726 = vpop.f32.mrf.mxu0
      %v1727 = vpop.f32.mrf.mxu0
      %v1728 = vadd.f32 %v1663, %v1727
      %v1729 = vpop.f32.mrf.mxu0
      %1730 = vdwg.mxu0
      %v1731 = vadd.f32 %v1298, %v1701
      %v1732 = vadd.f32 %v1301, %v1704
      %v1733 = vadd.f32 %v1306, %v1709
      %v1734 = vadd.f32 %v1309, %v1712
      %v1735 = vadd.f32 %v1314, %v1717
      %v1736 = vadd.f32 %v1317, %v1720
      %v1737 = vadd.f32 %v1322, %v1725
      %v1738 = vadd.f32 %v1325, %v1728
      %s1739 = sadd.s32 0, 16
      %s1740 = sshra.s32 %s1739, 3
      %s1741 = sand.u32 %s1739, 7
      %s1742 = smul.u32 %s1740, 3
      %s1743 = smul.addr %s1742, 4
      %s1744 = scalar_lea.vmem [#allocation2], %s1743
      %v1745 = vld [vmem:[%s1744] sm:$0xff]
      %v1746 = vld [vmem:[%s1744 + $0x8] sm:$0xf]
      %v1747 = vld [vmem:[%s1744 + $0xc] sm:$0xff]
      %v1748 = vld [vmem:[%s1744 + $0x14] sm:$0xf]
      %v1749 = vld [vmem:[%s1744 + $0x18] sm:$0xff]
      %v1750 = vld [vmem:[%s1744 + $0x20] sm:$0xf]
      %v1751 = vld [vmem:[%s1744 + $0x24] sm:$0xff]
      %v1752 = vld [vmem:[%s1744 + $0x2c] sm:$0xf]
      %v1753 = vld [vmem:[%s1744 + $0x30] sm:$0xff]
      %v1754 = vld [vmem:[%s1744 + $0x38] sm:$0xf]
      %v1755 = vld [vmem:[%s1744 + $0x3c] sm:$0xff]
      %v1756 = vld [vmem:[%s1744 + $0x44] sm:$0xf]
      %v1757 = vld [vmem:[%s1744 + $0x48] sm:$0xff]
      %v1758 = vld [vmem:[%s1744 + $0x50] sm:$0xf]
      %v1759 = vld [vmem:[%s1744 + $0x54] sm:$0xff]
      %v1760 = vld [vmem:[%s1744 + $0x5c] sm:$0xf]
      %s1761 = scalar_lea.vmem %s3, 384
      %v1762 = vld [vmem:[%s1761] sm:$0xf]
      %v1763 = vld [vmem:[%s1761 + $0x4] sm:$0xf]
      %v1764 = vld [vmem:[%s1761 + $0x8] sm:$0xf]
      %v1765 = vld [vmem:[%s1761 + $0xc] sm:$0xf]
      %v1766 = vld [vmem:[%s1761 + $0x10] sm:$0xf]
      %v1767 = vld [vmem:[%s1761 + $0x14] sm:$0xf]
      %v1768 = vld [vmem:[%s1761 + $0x18] sm:$0xf]
      %v1769 = vld [vmem:[%s1761 + $0x1c] sm:$0xf]
      %v1770 = vld [vmem:[%s1761 + $0x20] sm:$0xf]
      %v1771 = vld [vmem:[%s1761 + $0x24] sm:$0xf]
      %v1772 = vld [vmem:[%s1761 + $0x28] sm:$0xf]
      %v1773 = vld [vmem:[%s1761 + $0x2c] sm:$0xf]
      %v1774 = vld [vmem:[%s1761 + $0x30] sm:$0xf]
      %v1775 = vld [vmem:[%s1761 + $0x34] sm:$0xf]
      %v1776 = vld [vmem:[%s1761 + $0x38] sm:$0xf]
      %v1777 = vld [vmem:[%s1761 + $0x3c] sm:$0xf]
      %v1778 = vld [vmem:[%s1761 + $0x40] sm:$0xf]
      %v1779 = vld [vmem:[%s1761 + $0x44] sm:$0xf]
      %v1780 = vld [vmem:[%s1761 + $0x48] sm:$0xf]
      %v1781 = vld [vmem:[%s1761 + $0x4c] sm:$0xf]
      %v1782 = vld [vmem:[%s1761 + $0x50] sm:$0xf]
      %v1783 = vld [vmem:[%s1761 + $0x54] sm:$0xf]
      %v1784 = vld [vmem:[%s1761 + $0x58] sm:$0xf]
      %v1785 = vld [vmem:[%s1761 + $0x5c] sm:$0xf]
      %v1786 = vld [vmem:[%s1761 + $0x60] sm:$0xf]
      %v1787 = vld [vmem:[%s1761 + $0x64] sm:$0xf]
      %v1788 = vld [vmem:[%s1761 + $0x68] sm:$0xf]
      %v1789 = vld [vmem:[%s1761 + $0x6c] sm:$0xf]
      %v1790 = vld [vmem:[%s1761 + $0x70] sm:$0xf]
      %v1791 = vld [vmem:[%s1761 + $0x74] sm:$0xf]
      %v1792 = vld [vmem:[%s1761 + $0x78] sm:$0xf]
      %v1793 = vld [vmem:[%s1761 + $0x7c] sm:$0xf]
      %v1794 = vld [vmem:[%s1761 + $0x80] sm:$0xf]
      %v1795 = vld [vmem:[%s1761 + $0x84] sm:$0xf]
      %v1796 = vld [vmem:[%s1761 + $0x88] sm:$0xf]
      %v1797 = vld [vmem:[%s1761 + $0x8c] sm:$0xf]
      %v1798 = vld [vmem:[%s1761 + $0x90] sm:$0xf]
      %v1799 = vld [vmem:[%s1761 + $0x94] sm:$0xf]
      %v1800 = vld [vmem:[%s1761 + $0x98] sm:$0xf]
      %v1801 = vld [vmem:[%s1761 + $0x9c] sm:$0xf]
      %v1802 = vld [vmem:[%s1761 + $0xa0] sm:$0xf]
      %v1803 = vld [vmem:[%s1761 + $0xa4] sm:$0xf]
      %v1804 = vld [vmem:[%s1761 + $0xa8] sm:$0xf]
      %v1805 = vld [vmem:[%s1761 + $0xac] sm:$0xf]
      %v1806 = vld [vmem:[%s1761 + $0xb0] sm:$0xf]
      %v1807 = vld [vmem:[%s1761 + $0xb4] sm:$0xf]
      %v1808 = vld [vmem:[%s1761 + $0xb8] sm:$0xf]
      %v1809 = vld [vmem:[%s1761 + $0xbc] sm:$0xf]
      %v1826 = vunpack.c.l.b16 %v1745
      %v1827 = vunpack.c.h.b16 %v1745
      %v1828 = vunpack.c.l.b16 %v1746
      %v1829 = vunpack.c.l.b16 %v1747
      %v1830 = vunpack.c.h.b16 %v1747
      %v1831 = vunpack.c.l.b16 %v1748
      %v1832 = vunpack.c.l.b16 %v1749
      %v1833 = vunpack.c.h.b16 %v1749
      %v1834 = vunpack.c.l.b16 %v1750
      %v1835 = vunpack.c.l.b16 %v1751
      %v1836 = vunpack.c.h.b16 %v1751
      %v1837 = vunpack.c.l.b16 %v1752
      %v1838 = vunpack.c.l.b16 %v1753
      %v1839 = vunpack.c.h.b16 %v1753
      %v1840 = vunpack.c.l.b16 %v1754
      %v1841 = vunpack.c.l.b16 %v1755
      %v1842 = vunpack.c.h.b16 %v1755
      %v1843 = vunpack.c.l.b16 %v1756
      %v1844 = vunpack.c.l.b16 %v1757
      %v1845 = vunpack.c.h.b16 %v1757
      %v1846 = vunpack.c.l.b16 %v1758
      %v1847 = vunpack.c.l.b16 %v1759
      %v1848 = vunpack.c.h.b16 %v1759
      %v1849 = vunpack.c.l.b16 %v1760
      %v1850 = vpack.c.b16 %v1829, %v1826
      %v1851 = vpack.c.b16 %v1830, %v1827
      %v1852 = vpack.c.b16 %v1831, %v1828
      %v1853 = vpack.c.b16 %v1835, %v1832
      %v1854 = vpack.c.b16 %v1836, %v1833
      %v1855 = vpack.c.b16 %v1837, %v1834
      %v1856 = vpack.c.b16 %v1841, %v1838
      %v1857 = vpack.c.b16 %v1842, %v1839
      %v1858 = vpack.c.b16 %v1843, %v1840
      %v1859 = vpack.c.b16 %v1847, %v1844
      %v1860 = vpack.c.b16 %v1848, %v1845
      %v1861 = vpack.c.b16 %v1849, %v1846
      %v1922 = vunpack.c.l.b16 %v1762
      %v1923 = vunpack.c.l.b16 %v1763
      %v1924 = vunpack.c.l.b16 %v1764
      %v1925 = vunpack.c.l.b16 %v1765
      %v1926 = vunpack.c.l.b16 %v1766
      %v1927 = vunpack.c.l.b16 %v1767
      %v1928 = vunpack.c.l.b16 %v1768
      %v1929 = vunpack.c.l.b16 %v1769
      %v1930 = vunpack.c.l.b16 %v1770
      %v1931 = vunpack.c.l.b16 %v1771
      %v1932 = vunpack.c.l.b16 %v1772
      %v1933 = vunpack.c.l.b16 %v1773
      %v1934 = vunpack.c.l.b16 %v1774
      %v1935 = vunpack.c.l.b16 %v1775
      %v1936 = vunpack.c.l.b16 %v1776
      %v1937 = vunpack.c.l.b16 %v1777
      %v1938 = vunpack.c.l.b16 %v1778
      %v1939 = vunpack.c.l.b16 %v1779
      %v1940 = vunpack.c.l.b16 %v1780
      %v1941 = vunpack.c.l.b16 %v1781
      %v1942 = vunpack.c.l.b16 %v1782
      %v1943 = vunpack.c.l.b16 %v1783
      %v1944 = vunpack.c.l.b16 %v1784
      %v1945 = vunpack.c.l.b16 %v1785
      %v1946 = vunpack.c.l.b16 %v1786
      %v1947 = vunpack.c.l.b16 %v1787
      %v1948 = vunpack.c.l.b16 %v1788
      %v1949 = vunpack.c.l.b16 %v1789
      %v1950 = vunpack.c.l.b16 %v1790
      %v1951 = vunpack.c.l.b16 %v1791
      %v1952 = vunpack.c.l.b16 %v1792
      %v1953 = vunpack.c.l.b16 %v1793
      %v1954 = vunpack.c.l.b16 %v1794
      %v1955 = vunpack.c.l.b16 %v1795
      %v1956 = vunpack.c.l.b16 %v1796
      %v1957 = vunpack.c.l.b16 %v1797
      %v1958 = vunpack.c.l.b16 %v1798
      %v1959 = vunpack.c.l.b16 %v1799
      %v1960 = vunpack.c.l.b16 %v1800
      %v1961 = vunpack.c.l.b16 %v1801
      %v1962 = vunpack.c.l.b16 %v1802
      %v1963 = vunpack.c.l.b16 %v1803
      %v1964 = vunpack.c.l.b16 %v1804
      %v1965 = vunpack.c.l.b16 %v1805
      %v1966 = vunpack.c.l.b16 %v1806
      %v1967 = vunpack.c.l.b16 %v1807
      %v1968 = vunpack.c.l.b16 %v1808
      %v1969 = vunpack.c.l.b16 %v1809
      %v1970 = vpack.c.b16 %v1923, %v1922
      %v1971 = vpack.c.b16 %v1925, %v1924
      %v1972 = vpack.c.b16 %v1927, %v1926
      %v1973 = vpack.c.b16 %v1929, %v1928
      %v1974 = vpack.c.b16 %v1931, %v1930
      %v1975 = vpack.c.b16 %v1933, %v1932
      %v1976 = vpack.c.b16 %v1935, %v1934
      %v1977 = vpack.c.b16 %v1937, %v1936
      %v1978 = vpack.c.b16 %v1939, %v1938
      %v1979 = vpack.c.b16 %v1941, %v1940
      %v1980 = vpack.c.b16 %v1943, %v1942
      %v1981 = vpack.c.b16 %v1945, %v1944
      %v1982 = vpack.c.b16 %v1947, %v1946
      %v1983 = vpack.c.b16 %v1949, %v1948
      %v1984 = vpack.c.b16 %v1951, %v1950
      %v1985 = vpack.c.b16 %v1953, %v1952
      %v1986 = vpack.c.b16 %v1955, %v1954
      %v1987 = vpack.c.b16 %v1957, %v1956
      %v1988 = vpack.c.b16 %v1959, %v1958
      %v1989 = vpack.c.b16 %v1961, %v1960
      %v1990 = vpack.c.b16 %v1963, %v1962
      %v1991 = vpack.c.b16 %v1965, %v1964
      %v1992 = vpack.c.b16 %v1967, %v1966
      %v1993 = vpack.c.b16 %v1969, %v1968
      %2018 = vmatprep.subr.bf16.mxu0 0
      %2019 = vmatpush1.bf16.msra.mxu0 %v1977
      %2020 = vmatprep.subr.bf16.mxu0 0
      %2021 = vmatpush1.bf16.msra.mxu0 %v1976
      %2022 = vmatprep.subr.bf16.mxu0 0
      %2023 = vmatpush1.bf16.msra.mxu0 %v1975
      %2024 = vmatprep.subr.bf16.mxu0 0
      %2025 = vmatpush1.bf16.msra.mxu0 %v1974
      %2026 = vmatprep.subr.bf16.mxu0 0
      %2027 = vmatpush1.bf16.msra.mxu0 %v1973
      %2028 = vmatprep.subr.bf16.mxu0 0
      %2029 = vmatpush1.bf16.msra.mxu0 %v1972
      %2030 = vmatprep.subr.bf16.mxu0 0
      %2031 = vmatpush1.bf16.msra.mxu0 %v1971
      %2032 = vmatprep.subr.bf16.mxu0 0
      %2033 = vmatpush1.bf16.msra.mxu0 %v1970
      %2034 = vmatprep.subr.bf16.mxu0 0
      %2035 = vmatpush2.bf16.msra.mxu0 %v1985
      %2036 = vmatprep.subr.bf16.mxu0 0
      %2037 = vmatpush2.bf16.msra.mxu0 %v1984
      %2038 = vmatprep.subr.bf16.mxu0 0
      %2039 = vmatpush2.bf16.msra.mxu0 %v1983
      %2040 = vmatprep.subr.bf16.mxu0 0
      %2041 = vmatpush2.bf16.msra.mxu0 %v1982
      %2042 = vmatprep.subr.bf16.mxu0 0
      %2043 = vmatpush2.bf16.msra.mxu0 %v1981
      %2044 = vmatprep.subr.bf16.mxu0 0
      %2045 = vmatpush2.bf16.msra.mxu0 %v1980
      %2046 = vmatprep.subr.bf16.mxu0 0
      %2047 = vmatpush2.bf16.msra.mxu0 %v1979
      %2048 = vmatprep.subr.bf16.mxu0 0
      %2049 = vmatpush2.bf16.msra.mxu0 %v1978
      %2050 = vmatprep.mubr.bf16.mxu0 %v1851
      %2051 = vmatmul.mubr.bf16.gmra.mxu0 %v1850
      %v2052 = vpop.f32.mrf.mxu0
      %v2053 = vadd.f32 0.0, %v2052
      %v2054 = vpop.f32.mrf.mxu0
      %v2055 = vpop.f32.mrf.mxu0
      %v2056 = vadd.f32 0.0, %v2055
      %v2057 = vpop.f32.mrf.mxu0
      %2058 = vmatprep.mubr.bf16.mxu0 %v1854
      %2059 = vmatmul.mubr.bf16.gmra.mxu0 %v1853
      %v2060 = vpop.f32.mrf.mxu0
      %v2061 = vadd.f32 0.0, %v2060
      %v2062 = vpop.f32.mrf.mxu0
      %v2063 = vpop.f32.mrf.mxu0
      %v2064 = vadd.f32 0.0, %v2063
      %v2065 = vpop.f32.mrf.mxu0
      %2066 = vmatprep.mubr.bf16.mxu0 %v1857
      %2067 = vmatmul.mubr.bf16.gmra.mxu0 %v1856
      %v2068 = vpop.f32.mrf.mxu0
      %v2069 = vadd.f32 0.0, %v2068
      %v2070 = vpop.f32.mrf.mxu0
      %v2071 = vpop.f32.mrf.mxu0
      %v2072 = vadd.f32 0.0, %v2071
      %v2073 = vpop.f32.mrf.mxu0
      %2074 = vmatprep.mubr.bf16.mxu0 %v1860
      %2075 = vmatmul.mubr.bf16.gmra.mxu0 %v1859
      %v2076 = vpop.f32.mrf.mxu0
      %v2077 = vadd.f32 0.0, %v2076
      %v2078 = vpop.f32.mrf.mxu0
      %v2079 = vpop.f32.mrf.mxu0
      %v2080 = vadd.f32 0.0, %v2079
      %v2081 = vpop.f32.mrf.mxu0
      %2082 = vdwg.mxu0
      %2083 = vmatprep.subr.bf16.mxu0 0
      %2084 = vmatpush1.bf16.msra.mxu0 %v1993
      %2085 = vmatprep.subr.bf16.mxu0 0
      %2086 = vmatpush1.bf16.msra.mxu0 %v1992
      %2087 = vmatprep.subr.bf16.mxu0 0
      %2088 = vmatpush1.bf16.msra.mxu0 %v1991
      %2089 = vmatprep.subr.bf16.mxu0 0
      %2090 = vmatpush1.bf16.msra.mxu0 %v1990
      %2091 = vmatprep.subr.bf16.mxu0 0
      %2092 = vmatpush1.bf16.msra.mxu0 %v1989
      %2093 = vmatprep.subr.bf16.mxu0 0
      %2094 = vmatpush1.bf16.msra.mxu0 %v1988
      %2095 = vmatprep.subr.bf16.mxu0 0
      %2096 = vmatpush1.bf16.msra.mxu0 %v1987
      %2097 = vmatprep.subr.bf16.mxu0 0
      %2098 = vmatpush1.bf16.msra.mxu0 %v1986
      %2099 = vmatprep.subr.bf16.mxu0 0
      %2100 = vmatpush2.bf16.msra.mxu0 0
      %2101 = vmatprep.subr.bf16.mxu0 0
      %2102 = vmatpush2.bf16.msra.mxu0 0
      %2103 = vmatprep.subr.bf16.mxu0 0
      %2104 = vmatpush2.bf16.msra.mxu0 0
      %2105 = vmatprep.subr.bf16.mxu0 0
      %2106 = vmatpush2.bf16.msra.mxu0 0
      %2107 = vmatprep.subr.bf16.mxu0 0
      %2108 = vmatpush2.bf16.msra.mxu0 0
      %2109 = vmatprep.subr.bf16.mxu0 0
      %2110 = vmatpush2.bf16.msra.mxu0 0
      %2111 = vmatprep.subr.bf16.mxu0 0
      %2112 = vmatpush2.bf16.msra.mxu0 0
      %2113 = vmatprep.subr.bf16.mxu0 0
      %2114 = vmatpush2.bf16.msra.mxu0 0
      %2115 = vmatprep.mubr.bf16.mxu0 0
      %2116 = vmatmul.mubr.bf16.gmra.mxu0 %v1852
      %v2117 = vpop.f32.mrf.mxu0
      %v2118 = vadd.f32 %v2053, %v2117
      %v2119 = vpop.f32.mrf.mxu0
      %v2120 = vpop.f32.mrf.mxu0
      %v2121 = vadd.f32 %v2056, %v2120
      %v2122 = vpop.f32.mrf.mxu0
      %2123 = vmatprep.mubr.bf16.mxu0 0
      %2124 = vmatmul.mubr.bf16.gmra.mxu0 %v1855
      %v2125 = vpop.f32.mrf.mxu0
      %v2126 = vadd.f32 %v2061, %v2125
      %v2127 = vpop.f32.mrf.mxu0
      %v2128 = vpop.f32.mrf.mxu0
      %v2129 = vadd.f32 %v2064, %v2128
      %v2130 = vpop.f32.mrf.mxu0
      %2131 = vmatprep.mubr.bf16.mxu0 0
      %2132 = vmatmul.mubr.bf16.gmra.mxu0 %v1858
      %v2133 = vpop.f32.mrf.mxu0
      %v2134 = vadd.f32 %v2069, %v2133
      %v2135 = vpop.f32.mrf.mxu0
      %v2136 = vpop.f32.mrf.mxu0
      %v2137 = vadd.f32 %v2072, %v2136
      %v2138 = vpop.f32.mrf.mxu0
      %2139 = vmatprep.mubr.bf16.mxu0 0
      %2140 = vmatmul.mubr.bf16.gmra.mxu0 %v1861
      %v2141 = vpop.f32.mrf.mxu0
      %v2142 = vadd.f32 %v2077, %v2141
      %v2143 = vpop.f32.mrf.mxu0
      %v2144 = vpop.f32.mrf.mxu0
      %v2145 = vadd.f32 %v2080, %v2144
      %v2146 = vpop.f32.mrf.mxu0
      %2147 = vdwg.mxu0
      %v2148 = vadd.f32 %v1731, %v2118
      %v2149 = vadd.f32 %v1732, %v2121
      %v2150 = vadd.f32 %v1733, %v2126
      %v2151 = vadd.f32 %v1734, %v2129
      %v2152 = vadd.f32 %v1735, %v2134
      %v2153 = vadd.f32 %v1736, %v2137
      %v2154 = vadd.f32 %v1737, %v2142
      %v2155 = vadd.f32 %v1738, %v2145
      %v2156 = vld [vmem:[%s5] sm:$0x1]
      %v2158 = vlaneseq
      %v2159 = vshrl.u32 %v2158, 7
      %v2160 = vsub.s32 0, %v2159
      %v2161 = vrot.slane %v2156, %v2160
      %v2163 = vadd.f32 %v2148, %v2161
      %v2164 = vadd.f32 %v2149, %v2161
      %v2165 = vadd.f32 %v2150, %v2161
      %v2166 = vadd.f32 %v2151, %v2161
      %v2167 = vadd.f32 %v2152, %v2161
      %v2168 = vadd.f32 %v2153, %v2161
      %v2169 = vadd.f32 %v2154, %v2161
      %v2170 = vadd.f32 %v2155, %v2161
      %v2171 = vmax.f32 %v2163, 0.0
      %v2172 = vmax.f32 %v2164, 0.0
      %v2173 = vmax.f32 %v2165, 0.0
      %v2174 = vmax.f32 %v2166, 0.0
      %v2175 = vmax.f32 %v2167, 0.0
      %v2176 = vmax.f32 %v2168, 0.0
      %v2177 = vmax.f32 %v2169, 0.0
      %v2178 = vmax.f32 %v2170, 0.0
      %v2179 = vpack.c.bf16 %v2172, %v2171
      %v2180 = vpack.c.bf16 %v2174, %v2173
      %v2181 = vpack.c.bf16 %v2176, %v2175
      %v2182 = vpack.c.bf16 %v2178, %v2177
      %v2187 = vunpack.c.l.b16 %v2179
      %v2188 = vunpack.c.h.b16 %v2179
      %v2189 = vunpack.c.l.b16 %v2180
      %v2190 = vunpack.c.h.b16 %v2180
      %v2191 = vunpack.c.l.b16 %v2181
      %v2192 = vunpack.c.h.b16 %v2181
      %v2193 = vunpack.c.l.b16 %v2182
      %v2194 = vunpack.c.h.b16 %v2182
      %v2195 = vpack.c.b16 %v2187, %v2187
      %v2196 = vpack.c.b16 %v2188, %v2188
      %v2197 = vpack.c.b16 %v2189, %v2189
      %v2198 = vpack.c.b16 %v2190, %v2190
      %v2199 = vpack.c.b16 %v2191, %v2191
      %v2200 = vpack.c.b16 %v2192, %v2192
      %v2201 = vpack.c.b16 %v2193, %v2193
      %v2202 = vpack.c.b16 %v2194, %v2194
      %2211 = vst [vmem:[%s251] sm:$0xf] %v2195
      %2212 = vst [vmem:[%s251 + $0x4] sm:$0xf] %v2196
      %2213 = vst [vmem:[%s251 + $0x8] sm:$0xf] %v2197
      %2214 = vst [vmem:[%s251 + $0xc] sm:$0xf] %v2198
      %2215 = vst [vmem:[%s251 + $0x10] sm:$0xf] %v2199
      %2216 = vst [vmem:[%s251 + $0x14] sm:$0xf] %v2200
      %2217 = vst [vmem:[%s251 + $0x18] sm:$0xf] %v2201
      %2218 = vst [vmem:[%s251 + $0x1c] sm:$0xf] %v2202
      %p2219 = scmp.lt.s32.totalorder %s17, 1
      %s2220 = scalar_select %p2219, %s17, 1
      %s2221 = smul.addr %s2220, 8
      %s2222 = smul.addr %s2221, 4
      %s2223 = scalar_lea.vmem %s6, %s2222
      // Predicated region
      $region45: #{basic_block_forward.1} parent=43 // pred_check
        %p2224 = pneg %p166
      $region46: #{basic_block_forward.1} parent=43 // pred_check_branch
        %2226 = sbr.rel (%p2224) target = $region48
      $region47: #{basic_block_forward.1} parent=43 // pred_region
        _
      $region48: #{basic_block_forward.1} parent=43 // pred_fallthru
        _
    $region44: #{basic_block_forward.1} parent=5 // pred_fallthru
      _
    %p2227 = scmp.le.s32.totalorder 2, %s12
    // Predicated region
    $region49: #{basic_block_forward.1} parent=5 // pred_check
      %p2228 = pneg %p2227
    $region50: #{basic_block_forward.1} parent=5 // pred_check_branch
      %2230 = sbr.rel (%p2228) target = $region52
    $region51: #{basic_block_forward.1} parent=5 // pred_region
      %s2231 = ssub.s32 %s12, 2
      // Predicated region
      $region53: #{basic_block_forward.1} parent=51 // pred_check
        %p2232 = pneg %p172
      $region54: #{basic_block_forward.1} parent=51 // pred_check_branch
        %2234 = sbr.rel (%p2232) target = $region56
      $region55: #{basic_block_forward.1} parent=51 // pred_region
        %p2235 = scmp.lt.s32.totalorder %s18, 1
        %s2236 = scalar_select %p2235, %s18, 1
        %s2237 = smul.addr %s2236, 8
        %s2238 = smul.addr %s2237, 4
        %s2239 = scalar_lea.vmem %s6, %s2238
      $region56: #{basic_block_forward.1} parent=51 // pred_fallthru
        _
    $region52: #{basic_block_forward.1} parent=5 // pred_fallthru
      _
  $region6: #{basic_block_forward.1} parent=0 // loop_footer
    %s16 = sadd.s32 1, %s12
  $region7: #{basic_block_forward.1} parent=0 // loop_footer_branch
    %11 = sbr.rel target = $region3
  $region8: #{basic_block_forward.1} parent=0 // loop_exit
    _

</llo_original>
